<compile_context>
chip_gen: v7x
topology: tpu7x:2x2x1
jax: 0.10.0
libtpu: 0.0.40
codegen_flags: <defaults>
</compile_context>

<pallas_src>
import functools

import jax
import jax.numpy as jnp
from jax.experimental import pallas as pl
from jax.experimental.pallas import tpu as pltpu


_VMEM = pl.BlockSpec(memory_space=pltpu.MemorySpace.VMEM)


def _make_fused_kernel(num_layers: int, T: int, B: int, H: int, n_buf: int):
    """Fused BiLSTM stack + Linear + Softmax kernel (gridless, all VMEM).

    Ref order (as passed by pallas_call):
      x_ref [T*B, D],
      per layer: wih_cat [Din, 8H], b_cat [1, 8H], whh_f [H, 4H], whh_b [H, 4H],
      w_out_f [H, O], w_out_b [H, O], b_out [1, O],
      out_ref [T*B, O],
      scratch: n_buf pairs of (hid_f [T,B,H], hid_b [T,B,H]).
    Gate order inside every 4H block is the wrapper-permuted [i, f, o, g].
    """
    H2, H3, H4, H8 = 2 * H, 3 * H, 4 * H, 8 * H

    def kernel(x_ref, *refs):
        w_refs = refs[:4 * num_layers]
        w_out_f_ref, w_out_b_ref, b_out_ref, out_ref = (
            refs[4 * num_layers:4 * num_layers + 4])
        scr = refs[4 * num_layers + 4:]          # 2 * n_buf scratch refs

        def lstm_cell(h, c, xg_t, whh):
            gates = xg_t + jnp.dot(h, whh, preferred_element_type=jnp.float32)
            # Gate order [i, f, o, g]: sigmoid only over the first 3H lanes,
            # tanh only over the last H lanes (half the EUP work per step).
            sig = jax.nn.sigmoid(gates[:, :H3])
            g_g = jnp.tanh(gates[:, H3:H4])
            c_new = sig[:, H:H2] * c + sig[:, :H] * g_g
            h_new = sig[:, H2:H3] * jnp.tanh(c_new)
            return h_new, c_new

        for layer in range(num_layers):
            wih_ref, b_ref, whhf_ref, whhb_ref = w_refs[4 * layer:4 * (layer + 1)]
            slot = layer % n_buf
            hf_scr, hb_scr = scr[2 * slot], scr[2 * slot + 1]

            # One fused MXU matmul for BOTH directions' input projections over
            # the whole (time-major) sequence.
            if layer == 0:
                xg = (jnp.dot(x_ref[...].astype(jnp.float32), wih_ref[...],
                              preferred_element_type=jnp.float32)
                      + b_ref[...])                                 # [T*B, 8H]
            else:
                pslot = (layer - 1) % n_buf
                pf = scr[2 * pslot][...].reshape(T * B, H)
                pb = scr[2 * pslot + 1][...].reshape(T * B, H)
                xg = (jnp.dot(pf, wih_ref[0:H, :],
                              preferred_element_type=jnp.float32)
                      + jnp.dot(pb, wih_ref[H:H2, :],
                                preferred_element_type=jnp.float32)
                      + b_ref[...])                                 # [T*B, 8H]

            whhf = whhf_ref[...]
            whhb = whhb_ref[...]
            h_f = jnp.zeros((B, H), jnp.float32)
            c_f = jnp.zeros((B, H), jnp.float32)
            h_b = jnp.zeros((B, H), jnp.float32)
            c_b = jnp.zeros((B, H), jnp.float32)

            # Statically unrolled recurrence; forward (tf) and backward (tb)
            # directions interleaved so both directions' MXU/EUP/VPU work can
            # co-issue.  Time-major layout: each read is a contiguous row
            # block of xg, each store a full leading-index block of scratch.
            for s in range(T):
                tf, tb = s, T - 1 - s
                h_f, c_f = lstm_cell(h_f, c_f, xg[tf * B:(tf + 1) * B, 0:H4], whhf)
                h_b, c_b = lstm_cell(h_b, c_b, xg[tb * B:(tb + 1) * B, H4:H8], whhb)
                hf_scr[tf] = h_f
                hb_scr[tb] = h_b

        # Fused head: Linear(2H -> O) split per direction + Softmax.
        last = (num_layers - 1) % n_buf
        hf = scr[2 * last][...].reshape(T * B, H)
        hb = scr[2 * last + 1][...].reshape(T * B, H)
        logits = (jnp.dot(hf, w_out_f_ref[...], preferred_element_type=jnp.float32)
                  + jnp.dot(hb, w_out_b_ref[...], preferred_element_type=jnp.float32)
                  + b_out_ref[...])
        m = jnp.max(logits, axis=-1, keepdims=True)
        e = jnp.exp(logits - m)
        inv = pl.reciprocal(jnp.sum(e, axis=-1, keepdims=True))      # exact 1/x
        out_ref[...] = (e * inv).astype(out_ref.dtype)

    return kernel


@functools.partial(jax.jit, static_argnames=("num_layers",))
def slot_tag_forward(x_bt, params, num_layers):
    """Slot_tag.forward.  x_bt: [B, T, input_size] -> [B, T, output_size]."""
    B, T, D = x_bt.shape
    H = params["lstm"][0]["whh_f"].shape[0]
    O = params["w_out"].shape[1]

    def perm(w):  # gate columns (i, f, g, o) -> (i, f, o, g)
        return jnp.concatenate(
            [w[..., :2 * H], w[..., 3 * H:4 * H], w[..., 2 * H:3 * H]], axis=-1)

    # Time-major flat input: one XLA transpose in HBM, zero in-kernel relayouts.
    x_tm = jnp.transpose(x_bt, (1, 0, 2)).reshape(T * B, D)

    flat = [x_tm]
    for lp in params["lstm"]:
        wih_cat = jnp.concatenate([perm(lp["wih_f"]), perm(lp["wih_b"])], axis=1)
        b_cat = jnp.concatenate([perm(lp["b_f"]), perm(lp["b_b"])], axis=1)
        flat += [wih_cat, b_cat, perm(lp["whh_f"]), perm(lp["whh_b"])]
    flat += [params["w_out"][:H, :], params["w_out"][H:, :], params["b_out"]]

    n_buf = 1 if num_layers == 1 else 2  # ping-pong scratch pairs across layers

    out_flat = pl.pallas_call(
        _make_fused_kernel(num_layers, T, B, H, n_buf),
        out_shape=jax.ShapeDtypeStruct((T * B, O), jnp.float32),
        in_specs=[_VMEM] * len(flat),
        out_specs=_VMEM,
        scratch_shapes=[pltpu.VMEM((T, B, H), jnp.float32)] * (2 * n_buf),
        compiler_params=pltpu.CompilerParams(vmem_limit_bytes=32 * 1024 * 1024),
    )(*flat)

    return jnp.transpose(out_flat.reshape(T, B, O), (1, 0, 2))


def init_params(key, input_size, hidden_size, output_size, num_layers):
    """Deterministic synthetic parameters (PyTorch LSTM/Linear shapes)."""
    params = {"lstm": []}
    scale = 0.1
    for layer in range(num_layers):
        d_in = input_size if layer == 0 else 2 * hidden_size
        layer_p = {}
        for direction in ("f", "b"):
            key, k1, k2, k3, k4 = jax.random.split(key, 5)
            # PyTorch stores weight_ih [4H, D]; we keep it transposed [D, 4H].
            layer_p[f"wih_{direction}"] = scale * jax.random.normal(
                k1, (d_in, 4 * hidden_size), jnp.float32)
            layer_p[f"whh_{direction}"] = scale * jax.random.normal(
                k2, (hidden_size, 4 * hidden_size), jnp.float32)
            b_ih = scale * jax.random.normal(k3, (4 * hidden_size,), jnp.float32)
            b_hh = scale * jax.random.normal(k4, (4 * hidden_size,), jnp.float32)
            layer_p[f"b_{direction}"] = (b_ih + b_hh)[None, :]
        params["lstm"].append(layer_p)
    key, k1, k2 = jax.random.split(key, 3)
    params["w_out"] = scale * jax.random.normal(
        k1, (2 * hidden_size, output_size), jnp.float32)
    params["b_out"] = scale * jax.random.normal(k2, (1, output_size), jnp.float32)
    return params


# ----------------------------- pure-JAX reference --------------------------
def _reference(x_bt, params, num_layers, hidden_size):
    def cell(h, c, xg_t, whh):
        H = hidden_size
        gates = xg_t + h @ whh
        i = jax.nn.sigmoid(gates[:, 0:H])
        f = jax.nn.sigmoid(gates[:, H:2 * H])
        g = jnp.tanh(gates[:, 2 * H:3 * H])
        o = jax.nn.sigmoid(gates[:, 3 * H:4 * H])
        c = f * c + i * g
        return o * jnp.tanh(c), c

    x = jnp.transpose(x_bt, (1, 0, 2))  # [T, B, D]
    T, B, _ = x.shape
    for layer in range(num_layers):
        p = params["lstm"][layer]
        outs_f, outs_b = [], []
        h = c = jnp.zeros((B, hidden_size), jnp.float32)
        for t in range(T):
            h, c = cell(h, c, x[t] @ p["wih_f"] + p["b_f"], p["whh_f"])
            outs_f.append(h)
        h = c = jnp.zeros((B, hidden_size), jnp.float32)
        for t in range(T - 1, -1, -1):
            h, c = cell(h, c, x[t] @ p["wih_b"] + p["b_b"], p["whh_b"])
            outs_b.insert(0, h)
        x = jnp.concatenate([jnp.stack(outs_f), jnp.stack(outs_b)], axis=-1)
    logits = x @ params["w_out"] + params["b_out"]
    return jnp.transpose(jax.nn.softmax(logits, axis=-1), (1, 0, 2))


if __name__ == "__main__":
    # Slot_tag(input_size=32, hidden_size=32, droput=0.0, output_size=16,
    #          batch_size=2, num_layers=1, model_type=LSTM_ID)
    B, T = 2, 8
    input_size, hidden_size, output_size = 32, 32, 16

    key = jax.random.PRNGKey(0)
    key, kx = jax.random.split(key)
    x = jax.random.normal(kx, (B, T, input_size), jnp.float32)

    # --- num_layers = 1 (the module's test config) ---
    num_layers = 1
    params = init_params(key, input_size, hidden_size, output_size, num_layers)
    out = jax.block_until_ready(slot_tag_forward(x, params, num_layers))
    assert out.shape == (B, T, output_size), out.shape
    ref = _reference(x, params, num_layers, hidden_size)
    assert jnp.allclose(out, ref, atol=1e-5, rtol=1e-5), "mismatch vs reference (L=1)"
    assert jnp.allclose(jnp.sum(out, axis=-1), 1.0, atol=1e-5), "softmax rows != 1"

    # --- num_layers = 2 (exercises the ping-pong multi-layer path) ---
    key, k2 = jax.random.split(key)
    params2 = init_params(k2, input_size, hidden_size, output_size, 2)
    out2 = jax.block_until_ready(slot_tag_forward(x, params2, 2))
    ref2 = _reference(x, params2, 2, hidden_size)
    assert jnp.allclose(out2, ref2, atol=1e-5, rtol=1e-5), "mismatch vs reference (L=2)"

    print("KERNEL_OK")
</pallas_src>

<mosaic_0001>
module attributes {stable_mosaic.version = 11 : i64} {
  func.func @kernel(%arg0: memref<16x32xf32, #tpu.memory_space<vmem>>, %arg1: memref<32x256xf32, #tpu.memory_space<vmem>>, %arg2: memref<1x256xf32, #tpu.memory_space<vmem>>, %arg3: memref<32x128xf32, #tpu.memory_space<vmem>>, %arg4: memref<32x128xf32, #tpu.memory_space<vmem>>, %arg5: memref<32x16xf32, #tpu.memory_space<vmem>>, %arg6: memref<32x16xf32, #tpu.memory_space<vmem>>, %arg7: memref<1x16xf32, #tpu.memory_space<vmem>>, %arg8: memref<16x16xf32, #tpu.memory_space<vmem>>, %arg9: memref<8x2x32xf32, #tpu.memory_space<vmem>>, %arg10: memref<8x2x32xf32, #tpu.memory_space<vmem>>) attributes {dimension_semantics = [], scalar_prefetch = 0 : i64, scratch_operands = 2 : i64, tpu.core_type = #tpu.core_type<tc>} {
    %c0 = arith.constant 0 : index
    %c0_0 = arith.constant 0 : index
    %0 = vector.load %arg0[%c0, %c0_0] : memref<16x32xf32, #tpu.memory_space<vmem>>, vector<16x32xf32>
    %c0_1 = arith.constant 0 : index
    %c0_2 = arith.constant 0 : index
    %1 = vector.load %arg1[%c0_1, %c0_2] : memref<32x256xf32, #tpu.memory_space<vmem>>, vector<32x256xf32>
    %cst = arith.constant dense<0.000000e+00> : vector<16x256xf32>
    %2 = tpu.matmul %0, %1, %cst {dimension_numbers = #tpu.dot_dimension_numbers<[1], [0], [0], [1], [0, 0, 1, 1], [], []>} : vector<16x32xf32>, vector<32x256xf32>, vector<16x256xf32> -> vector<16x256xf32>
    %c0_3 = arith.constant 0 : index
    %c0_4 = arith.constant 0 : index
    %3 = vector.load %arg2[%c0_3, %c0_4] : memref<1x256xf32, #tpu.memory_space<vmem>>, vector<1x256xf32>
    %4 = vector.broadcast %3 : vector<1x256xf32> to vector<16x256xf32>
    %5 = arith.addf %2, %4 : vector<16x256xf32>
    %c0_5 = arith.constant 0 : index
    %c0_6 = arith.constant 0 : index
    %6 = vector.load %arg3[%c0_5, %c0_6] : memref<32x128xf32, #tpu.memory_space<vmem>>, vector<32x128xf32>
    %c0_7 = arith.constant 0 : index
    %c0_8 = arith.constant 0 : index
    %7 = vector.load %arg4[%c0_7, %c0_8] : memref<32x128xf32, #tpu.memory_space<vmem>>, vector<32x128xf32>
    %cst_9 = arith.constant 0.000000e+00 : f32
    %8 = vector.broadcast %cst_9 : f32 to vector<2x32xf32>
    %cst_10 = arith.constant 0.000000e+00 : f32
    %9 = vector.broadcast %cst_10 : f32 to vector<2x32xf32>
    %cst_11 = arith.constant 0.000000e+00 : f32
    %10 = vector.broadcast %cst_11 : f32 to vector<2x32xf32>
    %cst_12 = arith.constant 0.000000e+00 : f32
    %11 = vector.broadcast %cst_12 : f32 to vector<2x32xf32>
    %12 = vector.extract_strided_slice %5 {offsets = [0, 0], sizes = [2, 128], strides = [1, 1]} : vector<16x256xf32> to vector<2x128xf32>
    %cst_13 = arith.constant dense<0.000000e+00> : vector<2x128xf32>
    %13 = tpu.matmul %8, %6, %cst_13 {dimension_numbers = #tpu.dot_dimension_numbers<[1], [0], [0], [1], [0, 0, 1, 1], [], []>} : vector<2x32xf32>, vector<32x128xf32>, vector<2x128xf32> -> vector<2x128xf32>
    %14 = arith.addf %12, %13 : vector<2x128xf32>
    %15 = vector.extract_strided_slice %14 {offsets = [0, 0], sizes = [2, 96], strides = [1, 1]} : vector<2x128xf32> to vector<2x96xf32>
    %16 = arith.negf %15 : vector<2x96xf32>
    %17 = math.exp %16 : vector<2x96xf32>
    %cst_14 = arith.constant 1.000000e+00 : f32
    %18 = vector.broadcast %cst_14 : f32 to vector<2x96xf32>
    %19 = arith.addf %18, %17 : vector<2x96xf32>
    %20 = arith.divf %18, %19 : vector<2x96xf32>
    %21 = vector.extract_strided_slice %14 {offsets = [0, 96], sizes = [2, 32], strides = [1, 1]} : vector<2x128xf32> to vector<2x32xf32>
    %22 = math.tanh %21 : vector<2x32xf32>
    %23 = vector.extract_strided_slice %20 {offsets = [0, 32], sizes = [2, 32], strides = [1, 1]} : vector<2x96xf32> to vector<2x32xf32>
    %24 = arith.mulf %23, %9 : vector<2x32xf32>
    %25 = vector.extract_strided_slice %20 {offsets = [0, 0], sizes = [2, 32], strides = [1, 1]} : vector<2x96xf32> to vector<2x32xf32>
    %26 = arith.mulf %25, %22 : vector<2x32xf32>
    %27 = arith.addf %24, %26 : vector<2x32xf32>
    %28 = vector.extract_strided_slice %20 {offsets = [0, 64], sizes = [2, 32], strides = [1, 1]} : vector<2x96xf32> to vector<2x32xf32>
    %29 = math.tanh %27 : vector<2x32xf32>
    %30 = arith.mulf %28, %29 : vector<2x32xf32>
    %31 = vector.extract_strided_slice %5 {offsets = [14, 128], sizes = [2, 128], strides = [1, 1]} : vector<16x256xf32> to vector<2x128xf32>
    %cst_15 = arith.constant dense<0.000000e+00> : vector<2x128xf32>
    %32 = tpu.matmul %10, %7, %cst_15 {dimension_numbers = #tpu.dot_dimension_numbers<[1], [0], [0], [1], [0, 0, 1, 1], [], []>} : vector<2x32xf32>, vector<32x128xf32>, vector<2x128xf32> -> vector<2x128xf32>
    %33 = arith.addf %31, %32 : vector<2x128xf32>
    %34 = vector.extract_strided_slice %33 {offsets = [0, 0], sizes = [2, 96], strides = [1, 1]} : vector<2x128xf32> to vector<2x96xf32>
    %35 = arith.negf %34 : vector<2x96xf32>
    %36 = math.exp %35 : vector<2x96xf32>
    %cst_16 = arith.constant 1.000000e+00 : f32
    %37 = vector.broadcast %cst_16 : f32 to vector<2x96xf32>
    %38 = arith.addf %37, %36 : vector<2x96xf32>
    %39 = arith.divf %37, %38 : vector<2x96xf32>
    %40 = vector.extract_strided_slice %33 {offsets = [0, 96], sizes = [2, 32], strides = [1, 1]} : vector<2x128xf32> to vector<2x32xf32>
    %41 = math.tanh %40 : vector<2x32xf32>
    %42 = vector.extract_strided_slice %39 {offsets = [0, 32], sizes = [2, 32], strides = [1, 1]} : vector<2x96xf32> to vector<2x32xf32>
    %43 = arith.mulf %42, %11 : vector<2x32xf32>
    %44 = vector.extract_strided_slice %39 {offsets = [0, 0], sizes = [2, 32], strides = [1, 1]} : vector<2x96xf32> to vector<2x32xf32>
    %45 = arith.mulf %44, %41 : vector<2x32xf32>
    %46 = arith.addf %43, %45 : vector<2x32xf32>
    %47 = vector.extract_strided_slice %39 {offsets = [0, 64], sizes = [2, 32], strides = [1, 1]} : vector<2x96xf32> to vector<2x32xf32>
    %48 = math.tanh %46 : vector<2x32xf32>
    %49 = arith.mulf %47, %48 : vector<2x32xf32>
    %c0_17 = arith.constant 0 : index
    %c0_18 = arith.constant 0 : index
    %c0_19 = arith.constant 0 : index
    %50 = vector.load %arg9[%c0_17, %c0_18, %c0_19] : memref<8x2x32xf32, #tpu.memory_space<vmem>>, vector<1x2x32xf32>
    %51 = vector.shape_cast %50 : vector<1x2x32xf32> to vector<2x32xf32>
    %52 = vector.shape_cast %30 : vector<2x32xf32> to vector<1x2x32xf32>
    tpu.vector_store %arg9[%c0_17, %c0_18, %c0_19], %52 {strides = array<i32>} : memref<8x2x32xf32, #tpu.memory_space<vmem>>, vector<1x2x32xf32>,
    %c7 = arith.constant 7 : index
    %c0_20 = arith.constant 0 : index
    %c0_21 = arith.constant 0 : index
    %53 = vector.load %arg10[%c7, %c0_20, %c0_21] : memref<8x2x32xf32, #tpu.memory_space<vmem>>, vector<1x2x32xf32>
    %54 = vector.shape_cast %53 : vector<1x2x32xf32> to vector<2x32xf32>
    %55 = vector.shape_cast %49 : vector<2x32xf32> to vector<1x2x32xf32>
    tpu.vector_store %arg10[%c7, %c0_20, %c0_21], %55 {strides = array<i32>} : memref<8x2x32xf32, #tpu.memory_space<vmem>>, vector<1x2x32xf32>,
    %56 = vector.extract_strided_slice %5 {offsets = [2, 0], sizes = [2, 128], strides = [1, 1]} : vector<16x256xf32> to vector<2x128xf32>
    %cst_22 = arith.constant dense<0.000000e+00> : vector<2x128xf32>
    %57 = tpu.matmul %30, %6, %cst_22 {dimension_numbers = #tpu.dot_dimension_numbers<[1], [0], [0], [1], [0, 0, 1, 1], [], []>} : vector<2x32xf32>, vector<32x128xf32>, vector<2x128xf32> -> vector<2x128xf32>
    %58 = arith.addf %56, %57 : vector<2x128xf32>
    %59 = vector.extract_strided_slice %58 {offsets = [0, 0], sizes = [2, 96], strides = [1, 1]} : vector<2x128xf32> to vector<2x96xf32>
    %60 = arith.negf %59 : vector<2x96xf32>
    %61 = math.exp %60 : vector<2x96xf32>
    %cst_23 = arith.constant 1.000000e+00 : f32
    %62 = vector.broadcast %cst_23 : f32 to vector<2x96xf32>
    %63 = arith.addf %62, %61 : vector<2x96xf32>
    %64 = arith.divf %62, %63 : vector<2x96xf32>
    %65 = vector.extract_strided_slice %58 {offsets = [0, 96], sizes = [2, 32], strides = [1, 1]} : vector<2x128xf32> to vector<2x32xf32>
    %66 = math.tanh %65 : vector<2x32xf32>
    %67 = vector.extract_strided_slice %64 {offsets = [0, 32], sizes = [2, 32], strides = [1, 1]} : vector<2x96xf32> to vector<2x32xf32>
    %68 = arith.mulf %67, %27 : vector<2x32xf32>
    %69 = vector.extract_strided_slice %64 {offsets = [0, 0], sizes = [2, 32], strides = [1, 1]} : vector<2x96xf32> to vector<2x32xf32>
    %70 = arith.mulf %69, %66 : vector<2x32xf32>
    %71 = arith.addf %68, %70 : vector<2x32xf32>
    %72 = vector.extract_strided_slice %64 {offsets = [0, 64], sizes = [2, 32], strides = [1, 1]} : vector<2x96xf32> to vector<2x32xf32>
    %73 = math.tanh %71 : vector<2x32xf32>
    %74 = arith.mulf %72, %73 : vector<2x32xf32>
    %75 = vector.extract_strided_slice %5 {offsets = [12, 128], sizes = [2, 128], strides = [1, 1]} : vector<16x256xf32> to vector<2x128xf32>
    %cst_24 = arith.constant dense<0.000000e+00> : vector<2x128xf32>
    %76 = tpu.matmul %49, %7, %cst_24 {dimension_numbers = #tpu.dot_dimension_numbers<[1], [0], [0], [1], [0, 0, 1, 1], [], []>} : vector<2x32xf32>, vector<32x128xf32>, vector<2x128xf32> -> vector<2x128xf32>
    %77 = arith.addf %75, %76 : vector<2x128xf32>
    %78 = vector.extract_strided_slice %77 {offsets = [0, 0], sizes = [2, 96], strides = [1, 1]} : vector<2x128xf32> to vector<2x96xf32>
    %79 = arith.negf %78 : vector<2x96xf32>
    %80 = math.exp %79 : vector<2x96xf32>
    %cst_25 = arith.constant 1.000000e+00 : f32
    %81 = vector.broadcast %cst_25 : f32 to vector<2x96xf32>
    %82 = arith.addf %81, %80 : vector<2x96xf32>
    %83 = arith.divf %81, %82 : vector<2x96xf32>
    %84 = vector.extract_strided_slice %77 {offsets = [0, 96], sizes = [2, 32], strides = [1, 1]} : vector<2x128xf32> to vector<2x32xf32>
    %85 = math.tanh %84 : vector<2x32xf32>
    %86 = vector.extract_strided_slice %83 {offsets = [0, 32], sizes = [2, 32], strides = [1, 1]} : vector<2x96xf32> to vector<2x32xf32>
    %87 = arith.mulf %86, %46 : vector<2x32xf32>
    %88 = vector.extract_strided_slice %83 {offsets = [0, 0], sizes = [2, 32], strides = [1, 1]} : vector<2x96xf32> to vector<2x32xf32>
    %89 = arith.mulf %88, %85 : vector<2x32xf32>
    %90 = arith.addf %87, %89 : vector<2x32xf32>
    %91 = vector.extract_strided_slice %83 {offsets = [0, 64], sizes = [2, 32], strides = [1, 1]} : vector<2x96xf32> to vector<2x32xf32>
    %92 = math.tanh %90 : vector<2x32xf32>
    %93 = arith.mulf %91, %92 : vector<2x32xf32>
    %c1 = arith.constant 1 : index
    %c0_26 = arith.constant 0 : index
    %c0_27 = arith.constant 0 : index
    %94 = vector.load %arg9[%c1, %c0_26, %c0_27] : memref<8x2x32xf32, #tpu.memory_space<vmem>>, vector<1x2x32xf32>
    %95 = vector.shape_cast %94 : vector<1x2x32xf32> to vector<2x32xf32>
    %96 = vector.shape_cast %74 : vector<2x32xf32> to vector<1x2x32xf32>
    tpu.vector_store %arg9[%c1, %c0_26, %c0_27], %96 {strides = array<i32>} : memref<8x2x32xf32, #tpu.memory_space<vmem>>, vector<1x2x32xf32>,
    %c6 = arith.constant 6 : index
    %c0_28 = arith.constant 0 : index
    %c0_29 = arith.constant 0 : index
    %97 = vector.load %arg10[%c6, %c0_28, %c0_29] : memref<8x2x32xf32, #tpu.memory_space<vmem>>, vector<1x2x32xf32>
    %98 = vector.shape_cast %97 : vector<1x2x32xf32> to vector<2x32xf32>
    %99 = vector.shape_cast %93 : vector<2x32xf32> to vector<1x2x32xf32>
    tpu.vector_store %arg10[%c6, %c0_28, %c0_29], %99 {strides = array<i32>} : memref<8x2x32xf32, #tpu.memory_space<vmem>>, vector<1x2x32xf32>,
    %100 = vector.extract_strided_slice %5 {offsets = [4, 0], sizes = [2, 128], strides = [1, 1]} : vector<16x256xf32> to vector<2x128xf32>
    %cst_30 = arith.constant dense<0.000000e+00> : vector<2x128xf32>
    %101 = tpu.matmul %74, %6, %cst_30 {dimension_numbers = #tpu.dot_dimension_numbers<[1], [0], [0], [1], [0, 0, 1, 1], [], []>} : vector<2x32xf32>, vector<32x128xf32>, vector<2x128xf32> -> vector<2x128xf32>
    %102 = arith.addf %100, %101 : vector<2x128xf32>
    %103 = vector.extract_strided_slice %102 {offsets = [0, 0], sizes = [2, 96], strides = [1, 1]} : vector<2x128xf32> to vector<2x96xf32>
    %104 = arith.negf %103 : vector<2x96xf32>
    %105 = math.exp %104 : vector<2x96xf32>
    %cst_31 = arith.constant 1.000000e+00 : f32
    %106 = vector.broadcast %cst_31 : f32 to vector<2x96xf32>
    %107 = arith.addf %106, %105 : vector<2x96xf32>
    %108 = arith.divf %106, %107 : vector<2x96xf32>
    %109 = vector.extract_strided_slice %102 {offsets = [0, 96], sizes = [2, 32], strides = [1, 1]} : vector<2x128xf32> to vector<2x32xf32>
    %110 = math.tanh %109 : vector<2x32xf32>
    %111 = vector.extract_strided_slice %108 {offsets = [0, 32], sizes = [2, 32], strides = [1, 1]} : vector<2x96xf32> to vector<2x32xf32>
    %112 = arith.mulf %111, %71 : vector<2x32xf32>
    %113 = vector.extract_strided_slice %108 {offsets = [0, 0], sizes = [2, 32], strides = [1, 1]} : vector<2x96xf32> to vector<2x32xf32>
    %114 = arith.mulf %113, %110 : vector<2x32xf32>
    %115 = arith.addf %112, %114 : vector<2x32xf32>
    %116 = vector.extract_strided_slice %108 {offsets = [0, 64], sizes = [2, 32], strides = [1, 1]} : vector<2x96xf32> to vector<2x32xf32>
    %117 = math.tanh %115 : vector<2x32xf32>
    %118 = arith.mulf %116, %117 : vector<2x32xf32>
    %119 = vector.extract_strided_slice %5 {offsets = [10, 128], sizes = [2, 128], strides = [1, 1]} : vector<16x256xf32> to vector<2x128xf32>
    %cst_32 = arith.constant dense<0.000000e+00> : vector<2x128xf32>
    %120 = tpu.matmul %93, %7, %cst_32 {dimension_numbers = #tpu.dot_dimension_numbers<[1], [0], [0], [1], [0, 0, 1, 1], [], []>} : vector<2x32xf32>, vector<32x128xf32>, vector<2x128xf32> -> vector<2x128xf32>
    %121 = arith.addf %119, %120 : vector<2x128xf32>
    %122 = vector.extract_strided_slice %121 {offsets = [0, 0], sizes = [2, 96], strides = [1, 1]} : vector<2x128xf32> to vector<2x96xf32>
    %123 = arith.negf %122 : vector<2x96xf32>
    %124 = math.exp %123 : vector<2x96xf32>
    %cst_33 = arith.constant 1.000000e+00 : f32
    %125 = vector.broadcast %cst_33 : f32 to vector<2x96xf32>
    %126 = arith.addf %125, %124 : vector<2x96xf32>
    %127 = arith.divf %125, %126 : vector<2x96xf32>
    %128 = vector.extract_strided_slice %121 {offsets = [0, 96], sizes = [2, 32], strides = [1, 1]} : vector<2x128xf32> to vector<2x32xf32>
    %129 = math.tanh %128 : vector<2x32xf32>
    %130 = vector.extract_strided_slice %127 {offsets = [0, 32], sizes = [2, 32], strides = [1, 1]} : vector<2x96xf32> to vector<2x32xf32>
    %131 = arith.mulf %130, %90 : vector<2x32xf32>
    %132 = vector.extract_strided_slice %127 {offsets = [0, 0], sizes = [2, 32], strides = [1, 1]} : vector<2x96xf32> to vector<2x32xf32>
    %133 = arith.mulf %132, %129 : vector<2x32xf32>
    %134 = arith.addf %131, %133 : vector<2x32xf32>
    %135 = vector.extract_strided_slice %127 {offsets = [0, 64], sizes = [2, 32], strides = [1, 1]} : vector<2x96xf32> to vector<2x32xf32>
    %136 = math.tanh %134 : vector<2x32xf32>
    %137 = arith.mulf %135, %136 : vector<2x32xf32>
    %c2 = arith.constant 2 : index
    %c0_34 = arith.constant 0 : index
    %c0_35 = arith.constant 0 : index
    %138 = vector.load %arg9[%c2, %c0_34, %c0_35] : memref<8x2x32xf32, #tpu.memory_space<vmem>>, vector<1x2x32xf32>
    %139 = vector.shape_cast %138 : vector<1x2x32xf32> to vector<2x32xf32>
    %140 = vector.shape_cast %118 : vector<2x32xf32> to vector<1x2x32xf32>
    tpu.vector_store %arg9[%c2, %c0_34, %c0_35], %140 {strides = array<i32>} : memref<8x2x32xf32, #tpu.memory_space<vmem>>, vector<1x2x32xf32>,
    %c5 = arith.constant 5 : index
    %c0_36 = arith.constant 0 : index
    %c0_37 = arith.constant 0 : index
    %141 = vector.load %arg10[%c5, %c0_36, %c0_37] : memref<8x2x32xf32, #tpu.memory_space<vmem>>, vector<1x2x32xf32>
    %142 = vector.shape_cast %141 : vector<1x2x32xf32> to vector<2x32xf32>
    %143 = vector.shape_cast %137 : vector<2x32xf32> to vector<1x2x32xf32>
    tpu.vector_store %arg10[%c5, %c0_36, %c0_37], %143 {strides = array<i32>} : memref<8x2x32xf32, #tpu.memory_space<vmem>>, vector<1x2x32xf32>,
    %144 = vector.extract_strided_slice %5 {offsets = [6, 0], sizes = [2, 128], strides = [1, 1]} : vector<16x256xf32> to vector<2x128xf32>
    %cst_38 = arith.constant dense<0.000000e+00> : vector<2x128xf32>
    %145 = tpu.matmul %118, %6, %cst_38 {dimension_numbers = #tpu.dot_dimension_numbers<[1], [0], [0], [1], [0, 0, 1, 1], [], []>} : vector<2x32xf32>, vector<32x128xf32>, vector<2x128xf32> -> vector<2x128xf32>
    %146 = arith.addf %144, %145 : vector<2x128xf32>
    %147 = vector.extract_strided_slice %146 {offsets = [0, 0], sizes = [2, 96], strides = [1, 1]} : vector<2x128xf32> to vector<2x96xf32>
    %148 = arith.negf %147 : vector<2x96xf32>
    %149 = math.exp %148 : vector<2x96xf32>
    %cst_39 = arith.constant 1.000000e+00 : f32
    %150 = vector.broadcast %cst_39 : f32 to vector<2x96xf32>
    %151 = arith.addf %150, %149 : vector<2x96xf32>
    %152 = arith.divf %150, %151 : vector<2x96xf32>
    %153 = vector.extract_strided_slice %146 {offsets = [0, 96], sizes = [2, 32], strides = [1, 1]} : vector<2x128xf32> to vector<2x32xf32>
    %154 = math.tanh %153 : vector<2x32xf32>
    %155 = vector.extract_strided_slice %152 {offsets = [0, 32], sizes = [2, 32], strides = [1, 1]} : vector<2x96xf32> to vector<2x32xf32>
    %156 = arith.mulf %155, %115 : vector<2x32xf32>
    %157 = vector.extract_strided_slice %152 {offsets = [0, 0], sizes = [2, 32], strides = [1, 1]} : vector<2x96xf32> to vector<2x32xf32>
    %158 = arith.mulf %157, %154 : vector<2x32xf32>
    %159 = arith.addf %156, %158 : vector<2x32xf32>
    %160 = vector.extract_strided_slice %152 {offsets = [0, 64], sizes = [2, 32], strides = [1, 1]} : vector<2x96xf32> to vector<2x32xf32>
    %161 = math.tanh %159 : vector<2x32xf32>
    %162 = arith.mulf %160, %161 : vector<2x32xf32>
    %163 = vector.extract_strided_slice %5 {offsets = [8, 128], sizes = [2, 128], strides = [1, 1]} : vector<16x256xf32> to vector<2x128xf32>
    %cst_40 = arith.constant dense<0.000000e+00> : vector<2x128xf32>
    %164 = tpu.matmul %137, %7, %cst_40 {dimension_numbers = #tpu.dot_dimension_numbers<[1], [0], [0], [1], [0, 0, 1, 1], [], []>} : vector<2x32xf32>, vector<32x128xf32>, vector<2x128xf32> -> vector<2x128xf32>
    %165 = arith.addf %163, %164 : vector<2x128xf32>
    %166 = vector.extract_strided_slice %165 {offsets = [0, 0], sizes = [2, 96], strides = [1, 1]} : vector<2x128xf32> to vector<2x96xf32>
    %167 = arith.negf %166 : vector<2x96xf32>
    %168 = math.exp %167 : vector<2x96xf32>
    %cst_41 = arith.constant 1.000000e+00 : f32
    %169 = vector.broadcast %cst_41 : f32 to vector<2x96xf32>
    %170 = arith.addf %169, %168 : vector<2x96xf32>
    %171 = arith.divf %169, %170 : vector<2x96xf32>
    %172 = vector.extract_strided_slice %165 {offsets = [0, 96], sizes = [2, 32], strides = [1, 1]} : vector<2x128xf32> to vector<2x32xf32>
    %173 = math.tanh %172 : vector<2x32xf32>
    %174 = vector.extract_strided_slice %171 {offsets = [0, 32], sizes = [2, 32], strides = [1, 1]} : vector<2x96xf32> to vector<2x32xf32>
    %175 = arith.mulf %174, %134 : vector<2x32xf32>
    %176 = vector.extract_strided_slice %171 {offsets = [0, 0], sizes = [2, 32], strides = [1, 1]} : vector<2x96xf32> to vector<2x32xf32>
    %177 = arith.mulf %176, %173 : vector<2x32xf32>
    %178 = arith.addf %175, %177 : vector<2x32xf32>
    %179 = vector.extract_strided_slice %171 {offsets = [0, 64], sizes = [2, 32], strides = [1, 1]} : vector<2x96xf32> to vector<2x32xf32>
    %180 = math.tanh %178 : vector<2x32xf32>
    %181 = arith.mulf %179, %180 : vector<2x32xf32>
    %c3 = arith.constant 3 : index
    %c0_42 = arith.constant 0 : index
    %c0_43 = arith.constant 0 : index
    %182 = vector.load %arg9[%c3, %c0_42, %c0_43] : memref<8x2x32xf32, #tpu.memory_space<vmem>>, vector<1x2x32xf32>
    %183 = vector.shape_cast %182 : vector<1x2x32xf32> to vector<2x32xf32>
    %184 = vector.shape_cast %162 : vector<2x32xf32> to vector<1x2x32xf32>
    tpu.vector_store %arg9[%c3, %c0_42, %c0_43], %184 {strides = array<i32>} : memref<8x2x32xf32, #tpu.memory_space<vmem>>, vector<1x2x32xf32>,
    %c4 = arith.constant 4 : index
    %c0_44 = arith.constant 0 : index
    %c0_45 = arith.constant 0 : index
    %185 = vector.load %arg10[%c4, %c0_44, %c0_45] : memref<8x2x32xf32, #tpu.memory_space<vmem>>, vector<1x2x32xf32>
    %186 = vector.shape_cast %185 : vector<1x2x32xf32> to vector<2x32xf32>
    %187 = vector.shape_cast %181 : vector<2x32xf32> to vector<1x2x32xf32>
    tpu.vector_store %arg10[%c4, %c0_44, %c0_45], %187 {strides = array<i32>} : memref<8x2x32xf32, #tpu.memory_space<vmem>>, vector<1x2x32xf32>,
    %188 = vector.extract_strided_slice %5 {offsets = [8, 0], sizes = [2, 128], strides = [1, 1]} : vector<16x256xf32> to vector<2x128xf32>
    %cst_46 = arith.constant dense<0.000000e+00> : vector<2x128xf32>
    %189 = tpu.matmul %162, %6, %cst_46 {dimension_numbers = #tpu.dot_dimension_numbers<[1], [0], [0], [1], [0, 0, 1, 1], [], []>} : vector<2x32xf32>, vector<32x128xf32>, vector<2x128xf32> -> vector<2x128xf32>
    %190 = arith.addf %188, %189 : vector<2x128xf32>
    %191 = vector.extract_strided_slice %190 {offsets = [0, 0], sizes = [2, 96], strides = [1, 1]} : vector<2x128xf32> to vector<2x96xf32>
    %192 = arith.negf %191 : vector<2x96xf32>
    %193 = math.exp %192 : vector<2x96xf32>
    %cst_47 = arith.constant 1.000000e+00 : f32
    %194 = vector.broadcast %cst_47 : f32 to vector<2x96xf32>
    %195 = arith.addf %194, %193 : vector<2x96xf32>
    %196 = arith.divf %194, %195 : vector<2x96xf32>
    %197 = vector.extract_strided_slice %190 {offsets = [0, 96], sizes = [2, 32], strides = [1, 1]} : vector<2x128xf32> to vector<2x32xf32>
    %198 = math.tanh %197 : vector<2x32xf32>
    %199 = vector.extract_strided_slice %196 {offsets = [0, 32], sizes = [2, 32], strides = [1, 1]} : vector<2x96xf32> to vector<2x32xf32>
    %200 = arith.mulf %199, %159 : vector<2x32xf32>
    %201 = vector.extract_strided_slice %196 {offsets = [0, 0], sizes = [2, 32], strides = [1, 1]} : vector<2x96xf32> to vector<2x32xf32>
    %202 = arith.mulf %201, %198 : vector<2x32xf32>
    %203 = arith.addf %200, %202 : vector<2x32xf32>
    %204 = vector.extract_strided_slice %196 {offsets = [0, 64], sizes = [2, 32], strides = [1, 1]} : vector<2x96xf32> to vector<2x32xf32>
    %205 = math.tanh %203 : vector<2x32xf32>
    %206 = arith.mulf %204, %205 : vector<2x32xf32>
    %207 = vector.extract_strided_slice %5 {offsets = [6, 128], sizes = [2, 128], strides = [1, 1]} : vector<16x256xf32> to vector<2x128xf32>
    %cst_48 = arith.constant dense<0.000000e+00> : vector<2x128xf32>
    %208 = tpu.matmul %181, %7, %cst_48 {dimension_numbers = #tpu.dot_dimension_numbers<[1], [0], [0], [1], [0, 0, 1, 1], [], []>} : vector<2x32xf32>, vector<32x128xf32>, vector<2x128xf32> -> vector<2x128xf32>
    %209 = arith.addf %207, %208 : vector<2x128xf32>
    %210 = vector.extract_strided_slice %209 {offsets = [0, 0], sizes = [2, 96], strides = [1, 1]} : vector<2x128xf32> to vector<2x96xf32>
    %211 = arith.negf %210 : vector<2x96xf32>
    %212 = math.exp %211 : vector<2x96xf32>
    %cst_49 = arith.constant 1.000000e+00 : f32
    %213 = vector.broadcast %cst_49 : f32 to vector<2x96xf32>
    %214 = arith.addf %213, %212 : vector<2x96xf32>
    %215 = arith.divf %213, %214 : vector<2x96xf32>
    %216 = vector.extract_strided_slice %209 {offsets = [0, 96], sizes = [2, 32], strides = [1, 1]} : vector<2x128xf32> to vector<2x32xf32>
    %217 = math.tanh %216 : vector<2x32xf32>
    %218 = vector.extract_strided_slice %215 {offsets = [0, 32], sizes = [2, 32], strides = [1, 1]} : vector<2x96xf32> to vector<2x32xf32>
    %219 = arith.mulf %218, %178 : vector<2x32xf32>
    %220 = vector.extract_strided_slice %215 {offsets = [0, 0], sizes = [2, 32], strides = [1, 1]} : vector<2x96xf32> to vector<2x32xf32>
    %221 = arith.mulf %220, %217 : vector<2x32xf32>
    %222 = arith.addf %219, %221 : vector<2x32xf32>
    %223 = vector.extract_strided_slice %215 {offsets = [0, 64], sizes = [2, 32], strides = [1, 1]} : vector<2x96xf32> to vector<2x32xf32>
    %224 = math.tanh %222 : vector<2x32xf32>
    %225 = arith.mulf %223, %224 : vector<2x32xf32>
    %c4_50 = arith.constant 4 : index
    %c0_51 = arith.constant 0 : index
    %c0_52 = arith.constant 0 : index
    %226 = vector.load %arg9[%c4_50, %c0_51, %c0_52] : memref<8x2x32xf32, #tpu.memory_space<vmem>>, vector<1x2x32xf32>
    %227 = vector.shape_cast %226 : vector<1x2x32xf32> to vector<2x32xf32>
    %228 = vector.shape_cast %206 : vector<2x32xf32> to vector<1x2x32xf32>
    tpu.vector_store %arg9[%c4_50, %c0_51, %c0_52], %228 {strides = array<i32>} : memref<8x2x32xf32, #tpu.memory_space<vmem>>, vector<1x2x32xf32>,
    %c3_53 = arith.constant 3 : index
    %c0_54 = arith.constant 0 : index
    %c0_55 = arith.constant 0 : index
    %229 = vector.load %arg10[%c3_53, %c0_54, %c0_55] : memref<8x2x32xf32, #tpu.memory_space<vmem>>, vector<1x2x32xf32>
    %230 = vector.shape_cast %229 : vector<1x2x32xf32> to vector<2x32xf32>
    %231 = vector.shape_cast %225 : vector<2x32xf32> to vector<1x2x32xf32>
    tpu.vector_store %arg10[%c3_53, %c0_54, %c0_55], %231 {strides = array<i32>} : memref<8x2x32xf32, #tpu.memory_space<vmem>>, vector<1x2x32xf32>,
    %232 = vector.extract_strided_slice %5 {offsets = [10, 0], sizes = [2, 128], strides = [1, 1]} : vector<16x256xf32> to vector<2x128xf32>
    %cst_56 = arith.constant dense<0.000000e+00> : vector<2x128xf32>
    %233 = tpu.matmul %206, %6, %cst_56 {dimension_numbers = #tpu.dot_dimension_numbers<[1], [0], [0], [1], [0, 0, 1, 1], [], []>} : vector<2x32xf32>, vector<32x128xf32>, vector<2x128xf32> -> vector<2x128xf32>
    %234 = arith.addf %232, %233 : vector<2x128xf32>
    %235 = vector.extract_strided_slice %234 {offsets = [0, 0], sizes = [2, 96], strides = [1, 1]} : vector<2x128xf32> to vector<2x96xf32>
    %236 = arith.negf %235 : vector<2x96xf32>
    %237 = math.exp %236 : vector<2x96xf32>
    %cst_57 = arith.constant 1.000000e+00 : f32
    %238 = vector.broadcast %cst_57 : f32 to vector<2x96xf32>
    %239 = arith.addf %238, %237 : vector<2x96xf32>
    %240 = arith.divf %238, %239 : vector<2x96xf32>
    %241 = vector.extract_strided_slice %234 {offsets = [0, 96], sizes = [2, 32], strides = [1, 1]} : vector<2x128xf32> to vector<2x32xf32>
    %242 = math.tanh %241 : vector<2x32xf32>
    %243 = vector.extract_strided_slice %240 {offsets = [0, 32], sizes = [2, 32], strides = [1, 1]} : vector<2x96xf32> to vector<2x32xf32>
    %244 = arith.mulf %243, %203 : vector<2x32xf32>
    %245 = vector.extract_strided_slice %240 {offsets = [0, 0], sizes = [2, 32], strides = [1, 1]} : vector<2x96xf32> to vector<2x32xf32>
    %246 = arith.mulf %245, %242 : vector<2x32xf32>
    %247 = arith.addf %244, %246 : vector<2x32xf32>
    %248 = vector.extract_strided_slice %240 {offsets = [0, 64], sizes = [2, 32], strides = [1, 1]} : vector<2x96xf32> to vector<2x32xf32>
    %249 = math.tanh %247 : vector<2x32xf32>
    %250 = arith.mulf %248, %249 : vector<2x32xf32>
    %251 = vector.extract_strided_slice %5 {offsets = [4, 128], sizes = [2, 128], strides = [1, 1]} : vector<16x256xf32> to vector<2x128xf32>
    %cst_58 = arith.constant dense<0.000000e+00> : vector<2x128xf32>
    %252 = tpu.matmul %225, %7, %cst_58 {dimension_numbers = #tpu.dot_dimension_numbers<[1], [0], [0], [1], [0, 0, 1, 1], [], []>} : vector<2x32xf32>, vector<32x128xf32>, vector<2x128xf32> -> vector<2x128xf32>
    %253 = arith.addf %251, %252 : vector<2x128xf32>
    %254 = vector.extract_strided_slice %253 {offsets = [0, 0], sizes = [2, 96], strides = [1, 1]} : vector<2x128xf32> to vector<2x96xf32>
    %255 = arith.negf %254 : vector<2x96xf32>
    %256 = math.exp %255 : vector<2x96xf32>
    %cst_59 = arith.constant 1.000000e+00 : f32
    %257 = vector.broadcast %cst_59 : f32 to vector<2x96xf32>
    %258 = arith.addf %257, %256 : vector<2x96xf32>
    %259 = arith.divf %257, %258 : vector<2x96xf32>
    %260 = vector.extract_strided_slice %253 {offsets = [0, 96], sizes = [2, 32], strides = [1, 1]} : vector<2x128xf32> to vector<2x32xf32>
    %261 = math.tanh %260 : vector<2x32xf32>
    %262 = vector.extract_strided_slice %259 {offsets = [0, 32], sizes = [2, 32], strides = [1, 1]} : vector<2x96xf32> to vector<2x32xf32>
    %263 = arith.mulf %262, %222 : vector<2x32xf32>
    %264 = vector.extract_strided_slice %259 {offsets = [0, 0], sizes = [2, 32], strides = [1, 1]} : vector<2x96xf32> to vector<2x32xf32>
    %265 = arith.mulf %264, %261 : vector<2x32xf32>
    %266 = arith.addf %263, %265 : vector<2x32xf32>
    %267 = vector.extract_strided_slice %259 {offsets = [0, 64], sizes = [2, 32], strides = [1, 1]} : vector<2x96xf32> to vector<2x32xf32>
    %268 = math.tanh %266 : vector<2x32xf32>
    %269 = arith.mulf %267, %268 : vector<2x32xf32>
    %c5_60 = arith.constant 5 : index
    %c0_61 = arith.constant 0 : index
    %c0_62 = arith.constant 0 : index
    %270 = vector.load %arg9[%c5_60, %c0_61, %c0_62] : memref<8x2x32xf32, #tpu.memory_space<vmem>>, vector<1x2x32xf32>
    %271 = vector.shape_cast %270 : vector<1x2x32xf32> to vector<2x32xf32>
    %272 = vector.shape_cast %250 : vector<2x32xf32> to vector<1x2x32xf32>
    tpu.vector_store %arg9[%c5_60, %c0_61, %c0_62], %272 {strides = array<i32>} : memref<8x2x32xf32, #tpu.memory_space<vmem>>, vector<1x2x32xf32>,
    %c2_63 = arith.constant 2 : index
    %c0_64 = arith.constant 0 : index
    %c0_65 = arith.constant 0 : index
    %273 = vector.load %arg10[%c2_63, %c0_64, %c0_65] : memref<8x2x32xf32, #tpu.memory_space<vmem>>, vector<1x2x32xf32>
    %274 = vector.shape_cast %273 : vector<1x2x32xf32> to vector<2x32xf32>
    %275 = vector.shape_cast %269 : vector<2x32xf32> to vector<1x2x32xf32>
    tpu.vector_store %arg10[%c2_63, %c0_64, %c0_65], %275 {strides = array<i32>} : memref<8x2x32xf32, #tpu.memory_space<vmem>>, vector<1x2x32xf32>,
    %276 = vector.extract_strided_slice %5 {offsets = [12, 0], sizes = [2, 128], strides = [1, 1]} : vector<16x256xf32> to vector<2x128xf32>
    %cst_66 = arith.constant dense<0.000000e+00> : vector<2x128xf32>
    %277 = tpu.matmul %250, %6, %cst_66 {dimension_numbers = #tpu.dot_dimension_numbers<[1], [0], [0], [1], [0, 0, 1, 1], [], []>} : vector<2x32xf32>, vector<32x128xf32>, vector<2x128xf32> -> vector<2x128xf32>
    %278 = arith.addf %276, %277 : vector<2x128xf32>
    %279 = vector.extract_strided_slice %278 {offsets = [0, 0], sizes = [2, 96], strides = [1, 1]} : vector<2x128xf32> to vector<2x96xf32>
    %280 = arith.negf %279 : vector<2x96xf32>
    %281 = math.exp %280 : vector<2x96xf32>
    %cst_67 = arith.constant 1.000000e+00 : f32
    %282 = vector.broadcast %cst_67 : f32 to vector<2x96xf32>
    %283 = arith.addf %282, %281 : vector<2x96xf32>
    %284 = arith.divf %282, %283 : vector<2x96xf32>
    %285 = vector.extract_strided_slice %278 {offsets = [0, 96], sizes = [2, 32], strides = [1, 1]} : vector<2x128xf32> to vector<2x32xf32>
    %286 = math.tanh %285 : vector<2x32xf32>
    %287 = vector.extract_strided_slice %284 {offsets = [0, 32], sizes = [2, 32], strides = [1, 1]} : vector<2x96xf32> to vector<2x32xf32>
    %288 = arith.mulf %287, %247 : vector<2x32xf32>
    %289 = vector.extract_strided_slice %284 {offsets = [0, 0], sizes = [2, 32], strides = [1, 1]} : vector<2x96xf32> to vector<2x32xf32>
    %290 = arith.mulf %289, %286 : vector<2x32xf32>
    %291 = arith.addf %288, %290 : vector<2x32xf32>
    %292 = vector.extract_strided_slice %284 {offsets = [0, 64], sizes = [2, 32], strides = [1, 1]} : vector<2x96xf32> to vector<2x32xf32>
    %293 = math.tanh %291 : vector<2x32xf32>
    %294 = arith.mulf %292, %293 : vector<2x32xf32>
    %295 = vector.extract_strided_slice %5 {offsets = [2, 128], sizes = [2, 128], strides = [1, 1]} : vector<16x256xf32> to vector<2x128xf32>
    %cst_68 = arith.constant dense<0.000000e+00> : vector<2x128xf32>
    %296 = tpu.matmul %269, %7, %cst_68 {dimension_numbers = #tpu.dot_dimension_numbers<[1], [0], [0], [1], [0, 0, 1, 1], [], []>} : vector<2x32xf32>, vector<32x128xf32>, vector<2x128xf32> -> vector<2x128xf32>
    %297 = arith.addf %295, %296 : vector<2x128xf32>
    %298 = vector.extract_strided_slice %297 {offsets = [0, 0], sizes = [2, 96], strides = [1, 1]} : vector<2x128xf32> to vector<2x96xf32>
    %299 = arith.negf %298 : vector<2x96xf32>
    %300 = math.exp %299 : vector<2x96xf32>
    %cst_69 = arith.constant 1.000000e+00 : f32
    %301 = vector.broadcast %cst_69 : f32 to vector<2x96xf32>
    %302 = arith.addf %301, %300 : vector<2x96xf32>
    %303 = arith.divf %301, %302 : vector<2x96xf32>
    %304 = vector.extract_strided_slice %297 {offsets = [0, 96], sizes = [2, 32], strides = [1, 1]} : vector<2x128xf32> to vector<2x32xf32>
    %305 = math.tanh %304 : vector<2x32xf32>
    %306 = vector.extract_strided_slice %303 {offsets = [0, 32], sizes = [2, 32], strides = [1, 1]} : vector<2x96xf32> to vector<2x32xf32>
    %307 = arith.mulf %306, %266 : vector<2x32xf32>
    %308 = vector.extract_strided_slice %303 {offsets = [0, 0], sizes = [2, 32], strides = [1, 1]} : vector<2x96xf32> to vector<2x32xf32>
    %309 = arith.mulf %308, %305 : vector<2x32xf32>
    %310 = arith.addf %307, %309 : vector<2x32xf32>
    %311 = vector.extract_strided_slice %303 {offsets = [0, 64], sizes = [2, 32], strides = [1, 1]} : vector<2x96xf32> to vector<2x32xf32>
    %312 = math.tanh %310 : vector<2x32xf32>
    %313 = arith.mulf %311, %312 : vector<2x32xf32>
    %c6_70 = arith.constant 6 : index
    %c0_71 = arith.constant 0 : index
    %c0_72 = arith.constant 0 : index
    %314 = vector.load %arg9[%c6_70, %c0_71, %c0_72] : memref<8x2x32xf32, #tpu.memory_space<vmem>>, vector<1x2x32xf32>
    %315 = vector.shape_cast %314 : vector<1x2x32xf32> to vector<2x32xf32>
    %316 = vector.shape_cast %294 : vector<2x32xf32> to vector<1x2x32xf32>
    tpu.vector_store %arg9[%c6_70, %c0_71, %c0_72], %316 {strides = array<i32>} : memref<8x2x32xf32, #tpu.memory_space<vmem>>, vector<1x2x32xf32>,
    %c1_73 = arith.constant 1 : index
    %c0_74 = arith.constant 0 : index
    %c0_75 = arith.constant 0 : index
    %317 = vector.load %arg10[%c1_73, %c0_74, %c0_75] : memref<8x2x32xf32, #tpu.memory_space<vmem>>, vector<1x2x32xf32>
    %318 = vector.shape_cast %317 : vector<1x2x32xf32> to vector<2x32xf32>
    %319 = vector.shape_cast %313 : vector<2x32xf32> to vector<1x2x32xf32>
    tpu.vector_store %arg10[%c1_73, %c0_74, %c0_75], %319 {strides = array<i32>} : memref<8x2x32xf32, #tpu.memory_space<vmem>>, vector<1x2x32xf32>,
    %320 = vector.extract_strided_slice %5 {offsets = [14, 0], sizes = [2, 128], strides = [1, 1]} : vector<16x256xf32> to vector<2x128xf32>
    %cst_76 = arith.constant dense<0.000000e+00> : vector<2x128xf32>
    %321 = tpu.matmul %294, %6, %cst_76 {dimension_numbers = #tpu.dot_dimension_numbers<[1], [0], [0], [1], [0, 0, 1, 1], [], []>} : vector<2x32xf32>, vector<32x128xf32>, vector<2x128xf32> -> vector<2x128xf32>
    %322 = arith.addf %320, %321 : vector<2x128xf32>
    %323 = vector.extract_strided_slice %322 {offsets = [0, 0], sizes = [2, 96], strides = [1, 1]} : vector<2x128xf32> to vector<2x96xf32>
    %324 = arith.negf %323 : vector<2x96xf32>
    %325 = math.exp %324 : vector<2x96xf32>
    %cst_77 = arith.constant 1.000000e+00 : f32
    %326 = vector.broadcast %cst_77 : f32 to vector<2x96xf32>
    %327 = arith.addf %326, %325 : vector<2x96xf32>
    %328 = arith.divf %326, %327 : vector<2x96xf32>
    %329 = vector.extract_strided_slice %322 {offsets = [0, 96], sizes = [2, 32], strides = [1, 1]} : vector<2x128xf32> to vector<2x32xf32>
    %330 = math.tanh %329 : vector<2x32xf32>
    %331 = vector.extract_strided_slice %328 {offsets = [0, 32], sizes = [2, 32], strides = [1, 1]} : vector<2x96xf32> to vector<2x32xf32>
    %332 = arith.mulf %331, %291 : vector<2x32xf32>
    %333 = vector.extract_strided_slice %328 {offsets = [0, 0], sizes = [2, 32], strides = [1, 1]} : vector<2x96xf32> to vector<2x32xf32>
    %334 = arith.mulf %333, %330 : vector<2x32xf32>
    %335 = arith.addf %332, %334 : vector<2x32xf32>
    %336 = vector.extract_strided_slice %328 {offsets = [0, 64], sizes = [2, 32], strides = [1, 1]} : vector<2x96xf32> to vector<2x32xf32>
    %337 = math.tanh %335 : vector<2x32xf32>
    %338 = arith.mulf %336, %337 : vector<2x32xf32>
    %339 = vector.extract_strided_slice %5 {offsets = [0, 128], sizes = [2, 128], strides = [1, 1]} : vector<16x256xf32> to vector<2x128xf32>
    %cst_78 = arith.constant dense<0.000000e+00> : vector<2x128xf32>
    %340 = tpu.matmul %313, %7, %cst_78 {dimension_numbers = #tpu.dot_dimension_numbers<[1], [0], [0], [1], [0, 0, 1, 1], [], []>} : vector<2x32xf32>, vector<32x128xf32>, vector<2x128xf32> -> vector<2x128xf32>
    %341 = arith.addf %339, %340 : vector<2x128xf32>
    %342 = vector.extract_strided_slice %341 {offsets = [0, 0], sizes = [2, 96], strides = [1, 1]} : vector<2x128xf32> to vector<2x96xf32>
    %343 = arith.negf %342 : vector<2x96xf32>
    %344 = math.exp %343 : vector<2x96xf32>
    %cst_79 = arith.constant 1.000000e+00 : f32
    %345 = vector.broadcast %cst_79 : f32 to vector<2x96xf32>
    %346 = arith.addf %345, %344 : vector<2x96xf32>
    %347 = arith.divf %345, %346 : vector<2x96xf32>
    %348 = vector.extract_strided_slice %341 {offsets = [0, 96], sizes = [2, 32], strides = [1, 1]} : vector<2x128xf32> to vector<2x32xf32>
    %349 = math.tanh %348 : vector<2x32xf32>
    %350 = vector.extract_strided_slice %347 {offsets = [0, 32], sizes = [2, 32], strides = [1, 1]} : vector<2x96xf32> to vector<2x32xf32>
    %351 = arith.mulf %350, %310 : vector<2x32xf32>
    %352 = vector.extract_strided_slice %347 {offsets = [0, 0], sizes = [2, 32], strides = [1, 1]} : vector<2x96xf32> to vector<2x32xf32>
    %353 = arith.mulf %352, %349 : vector<2x32xf32>
    %354 = arith.addf %351, %353 : vector<2x32xf32>
    %355 = vector.extract_strided_slice %347 {offsets = [0, 64], sizes = [2, 32], strides = [1, 1]} : vector<2x96xf32> to vector<2x32xf32>
    %356 = math.tanh %354 : vector<2x32xf32>
    %357 = arith.mulf %355, %356 : vector<2x32xf32>
    %c7_80 = arith.constant 7 : index
    %c0_81 = arith.constant 0 : index
    %c0_82 = arith.constant 0 : index
    %358 = vector.load %arg9[%c7_80, %c0_81, %c0_82] : memref<8x2x32xf32, #tpu.memory_space<vmem>>, vector<1x2x32xf32>
    %359 = vector.shape_cast %358 : vector<1x2x32xf32> to vector<2x32xf32>
    %360 = vector.shape_cast %338 : vector<2x32xf32> to vector<1x2x32xf32>
    tpu.vector_store %arg9[%c7_80, %c0_81, %c0_82], %360 {strides = array<i32>} : memref<8x2x32xf32, #tpu.memory_space<vmem>>, vector<1x2x32xf32>,
    %c0_83 = arith.constant 0 : index
    %c0_84 = arith.constant 0 : index
    %c0_85 = arith.constant 0 : index
    %361 = vector.load %arg10[%c0_83, %c0_84, %c0_85] : memref<8x2x32xf32, #tpu.memory_space<vmem>>, vector<1x2x32xf32>
    %362 = vector.shape_cast %361 : vector<1x2x32xf32> to vector<2x32xf32>
    %363 = vector.shape_cast %357 : vector<2x32xf32> to vector<1x2x32xf32>
    tpu.vector_store %arg10[%c0_83, %c0_84, %c0_85], %363 {strides = array<i32>} : memref<8x2x32xf32, #tpu.memory_space<vmem>>, vector<1x2x32xf32>,
    %c0_86 = arith.constant 0 : index
    %c0_87 = arith.constant 0 : index
    %c0_88 = arith.constant 0 : index
    %364 = vector.load %arg9[%c0_86, %c0_87, %c0_88] : memref<8x2x32xf32, #tpu.memory_space<vmem>>, vector<8x2x32xf32>
    %365 = vector.shape_cast %364 : vector<8x2x32xf32> to vector<16x32xf32>
    %c0_89 = arith.constant 0 : index
    %c0_90 = arith.constant 0 : index
    %c0_91 = arith.constant 0 : index
    %366 = vector.load %arg10[%c0_89, %c0_90, %c0_91] : memref<8x2x32xf32, #tpu.memory_space<vmem>>, vector<8x2x32xf32>
    %367 = vector.shape_cast %366 : vector<8x2x32xf32> to vector<16x32xf32>
    %c0_92 = arith.constant 0 : index
    %c0_93 = arith.constant 0 : index
    %368 = vector.load %arg5[%c0_92, %c0_93] : memref<32x16xf32, #tpu.memory_space<vmem>>, vector<32x16xf32>
    %cst_94 = arith.constant dense<0.000000e+00> : vector<16x16xf32>
    %369 = tpu.matmul %365, %368, %cst_94 {dimension_numbers = #tpu.dot_dimension_numbers<[1], [0], [0], [1], [0, 0, 1, 1], [], []>} : vector<16x32xf32>, vector<32x16xf32>, vector<16x16xf32> -> vector<16x16xf32>
    %c0_95 = arith.constant 0 : index
    %c0_96 = arith.constant 0 : index
    %370 = vector.load %arg6[%c0_95, %c0_96] : memref<32x16xf32, #tpu.memory_space<vmem>>, vector<32x16xf32>
    %cst_97 = arith.constant dense<0.000000e+00> : vector<16x16xf32>
    %371 = tpu.matmul %367, %370, %cst_97 {dimension_numbers = #tpu.dot_dimension_numbers<[1], [0], [0], [1], [0, 0, 1, 1], [], []>} : vector<16x32xf32>, vector<32x16xf32>, vector<16x16xf32> -> vector<16x16xf32>
    %372 = arith.addf %369, %371 : vector<16x16xf32>
    %c0_98 = arith.constant 0 : index
    %c0_99 = arith.constant 0 : index
    %373 = vector.load %arg7[%c0_98, %c0_99] : memref<1x16xf32, #tpu.memory_space<vmem>>, vector<1x16xf32>
    %374 = vector.broadcast %373 : vector<1x16xf32> to vector<16x16xf32>
    %375 = arith.addf %372, %374 : vector<16x16xf32>
    %cst_100 = arith.constant dense<0xFF800000> : vector<16xf32>
    %376 = vector.multi_reduction <maximumf>, %375, %cst_100 [1] : vector<16x16xf32> to vector<16xf32>
    %377 = vector.shape_cast %376 : vector<16xf32> to vector<16x1xf32>
    %378 = vector.broadcast %377 : vector<16x1xf32> to vector<16x16xf32>
    %379 = arith.subf %375, %378 : vector<16x16xf32>
    %380 = math.exp %379 : vector<16x16xf32>
    %cst_101 = arith.constant dense<0.000000e+00> : vector<16xf32>
    %381 = vector.multi_reduction <add>, %380, %cst_101 [1] : vector<16x16xf32> to vector<16xf32>
    %382 = vector.shape_cast %381 : vector<16xf32> to vector<16x1xf32>
    %383 = tpu.reciprocal %382 : vector<16x1xf32> -> vector<16x1xf32>
    %384 = vector.broadcast %383 : vector<16x1xf32> to vector<16x16xf32>
    %385 = arith.mulf %380, %384 : vector<16x16xf32>
    %c0_102 = arith.constant 0 : index
    %c0_103 = arith.constant 0 : index
    %386 = vector.load %arg8[%c0_102, %c0_103] : memref<16x16xf32, #tpu.memory_space<vmem>>, vector<16x16xf32>
    tpu.vector_store %arg8[%c0_102, %c0_103], %385 {strides = array<i32>} : memref<16x16xf32, #tpu.memory_space<vmem>>, vector<16x16xf32>,
    return
  }
}

</mosaic_0001>

<llo_original>
// kernel: slot_tag_forward.1
$region0: #{slot_tag_forward.1}
  #allocation0 [shape = 'u32[]', space=smem, size = 0x4, offset = 0x4, fixed_abs, tag = 'smem constant byte address 0x4 - core index']
  #allocation1 [shape = 'u32[144,128]{1,0:T(1,128)}', space=vmem, size = 0x12000, scoped, tag = 'internal scratch']
  #allocation2 [shape = 'f32[8,2,32]{2,1,0:T(2,128)}', space=vmem, size = 0x2000, scoped, tag = 'scratch operand']
  #allocation3 [shape = 'f32[8,2,32]{2,1,0:T(2,128)}', space=vmem, size = 0x2000, scoped, tag = 'scratch operand']
  %s0 = inlined_call_operand.vmem [shape: f32[16,32], index: 0, kind: input, shape index: {}]
  %s1 = inlined_call_operand.vmem [shape: f32[32,256], index: 1, kind: input, shape index: {}]
  %s2 = inlined_call_operand.vmem [shape: f32[1,256], index: 2, kind: input, shape index: {}]
  %s3 = inlined_call_operand.vmem [shape: f32[32,128], index: 3, kind: input, shape index: {}]
  %s4 = inlined_call_operand.vmem [shape: f32[32,128], index: 4, kind: input, shape index: {}]
  %s5 = inlined_call_operand.vmem [shape: f32[32,16], index: 5, kind: input, shape index: {}]
  %s6 = inlined_call_operand.vmem [shape: f32[32,16], index: 6, kind: input, shape index: {}]
  %s7 = inlined_call_operand.vmem [shape: f32[1,16], index: 7, kind: input, shape index: {}]
  %s8 = inlined_call_operand.vmem [shape: f32[16,16], index: 8, kind: output, shape index: {}]
  %s9 = sld [smem:[#allocation0]]
  $region42: #{slot_tag_forward.1} parent=0
    _
  %s11 = ssub.s32 1, %s9
  %s12 = scalar_select 0, %s11, %s9
  // Predicated region
  $region2: #{slot_tag_forward.1} parent=0 // pred_check
    _
  $region3: #{slot_tag_forward.1} parent=0 // pred_check_branch
    %14 = sbr.rel (0) target = $region5
  $region4: #{slot_tag_forward.1} parent=0 // pred_region
    _
  $region5: #{slot_tag_forward.1} parent=0 // pred_fallthru
    _
  // Predicated region
  $region6: #{slot_tag_forward.1} parent=0 // pred_check
    _
  $region7: #{slot_tag_forward.1} parent=0 // pred_check_branch
    %16 = sbr.rel (0) target = $region9
  $region8: #{slot_tag_forward.1} parent=0 // pred_region
    _
  $region9: #{slot_tag_forward.1} parent=0 // pred_fallthru
    _
  // Predicated region
  $region10: #{slot_tag_forward.1} parent=0 // pred_check
    _
  $region11: #{slot_tag_forward.1} parent=0 // pred_check_branch
    %18 = sbr.rel (0) target = $region13
  $region12: #{slot_tag_forward.1} parent=0 // pred_region
    _
  $region13: #{slot_tag_forward.1} parent=0 // pred_fallthru
    _
  // Predicated region
  $region14: #{slot_tag_forward.1} parent=0 // pred_check
    _
  $region15: #{slot_tag_forward.1} parent=0 // pred_check_branch
    %20 = sbr.rel (0) target = $region17
  $region16: #{slot_tag_forward.1} parent=0 // pred_region
    _
  $region17: #{slot_tag_forward.1} parent=0 // pred_fallthru
    _
  // Predicated region
  $region18: #{slot_tag_forward.1} parent=0 // pred_check
    _
  $region19: #{slot_tag_forward.1} parent=0 // pred_check_branch
    %22 = sbr.rel (0) target = $region21
  $region20: #{slot_tag_forward.1} parent=0 // pred_region
    _
  $region21: #{slot_tag_forward.1} parent=0 // pred_fallthru
    _
  // Predicated region
  $region22: #{slot_tag_forward.1} parent=0 // pred_check
    _
  $region23: #{slot_tag_forward.1} parent=0 // pred_check_branch
    %24 = sbr.rel (0) target = $region25
  $region24: #{slot_tag_forward.1} parent=0 // pred_region
    _
  $region25: #{slot_tag_forward.1} parent=0 // pred_fallthru
    _
  // Predicated region
  $region26: #{slot_tag_forward.1} parent=0 // pred_check
    _
  $region27: #{slot_tag_forward.1} parent=0 // pred_check_branch
    %26 = sbr.rel (0) target = $region29
  $region28: #{slot_tag_forward.1} parent=0 // pred_region
    _
  $region29: #{slot_tag_forward.1} parent=0 // pred_fallthru
    _
  // Predicated region
  $region30: #{slot_tag_forward.1} parent=0 // pred_check
    _
  $region31: #{slot_tag_forward.1} parent=0 // pred_check_branch
    %28 = sbr.rel (0) target = $region33
  $region32: #{slot_tag_forward.1} parent=0 // pred_region
    _
  $region33: #{slot_tag_forward.1} parent=0 // pred_fallthru
    _
  %v29 = vld [vmem:[%s0] sm:$0xff]
  %v30 = vld [vmem:[%s0 + $0x8] sm:$0xff]
  %v31 = vld [vmem:[%s1] sm:$0xff]
  %v32 = vld [vmem:[%s1 + $0x8] sm:$0xff]
  %v33 = vld [vmem:[%s1 + $0x10] sm:$0xff]
  %v34 = vld [vmem:[%s1 + $0x18] sm:$0xff]
  %v35 = vld [vmem:[%s1 + $0x20] sm:$0xff]
  %v36 = vld [vmem:[%s1 + $0x28] sm:$0xff]
  %v37 = vld [vmem:[%s1 + $0x30] sm:$0xff]
  %v38 = vld [vmem:[%s1 + $0x38] sm:$0xff]
  %v39 = vld [vmem:[%s2] sm:$0x3]
  %v41 = vlaneseq
  %v42 = vshrl.u32 %v41, 7
  %v43 = vsub.s32 0, %v42
  %v44 = vrot.slane %v39, %v43
  %v45 = vlaneseq
  %v46 = vshrl.u32 %v45, 7
  %v47 = vsub.s32 1, %v46
  %v48 = vrot.slane %v39, %v47
  %vm51 = vcmask 261120
  %v53 = vsel %vm51, %v29, 0
  %v56 = vsel %vm51, %v30, 0
  %58 = vmatprep.subr.mxu0 %v32
  %59 = vmatpush1.msra.mxu0 %v31
  %60 = vmatprep.subr.mxu0 %v34
  %61 = vmatpush1.msra.mxu0 %v33
  %62 = vmatprep.subr.mxu0 %v36
  %63 = vmatpush1.msra.mxu0 %v35
  %64 = vmatprep.subr.mxu0 %v38
  %65 = vmatpush1.msra.mxu0 %v37
  %66 = vmatprep.subr.mxu0 0.0
  %67 = vmatpush1.msra.mxu0 0.0
  %68 = vmatprep.subr.mxu0 0.0
  %69 = vmatpush1.msra.mxu0 0.0
  %70 = vmatprep.subr.mxu0 0.0
  %71 = vmatpush1.msra.mxu0 0.0
  %72 = vmatprep.subr.mxu0 0.0
  %73 = vmatpush1.msra.mxu0 0.0
  %74 = vmatprep.subr.mxu0 0.0
  %75 = vmatpush1.msra.mxu0 0.0
  %76 = vmatprep.subr.mxu0 0.0
  %77 = vmatpush1.msra.mxu0 0.0
  %78 = vmatprep.subr.mxu0 0.0
  %79 = vmatpush1.msra.mxu0 0.0
  %80 = vmatprep.subr.mxu0 0.0
  %81 = vmatpush1.msra.mxu0 0.0
  %82 = vmatprep.subr.mxu0 0.0
  %83 = vmatpush1.msra.mxu0 0.0
  %84 = vmatprep.subr.mxu0 0.0
  %85 = vmatpush1.msra.mxu0 0.0
  %86 = vmatprep.subr.mxu0 0.0
  %87 = vmatpush1.msra.mxu0 0.0
  %88 = vmatprep.subr.mxu0 0.0
  %89 = vmatpush1.msra.mxu0 0.0
  %90 = vmatprep.subr.mxu0 0.0
  %91 = vmatpush1.msra.mxu0 0.0
  %92 = vmatprep.subr.mxu0 0.0
  %93 = vmatpush1.msra.mxu0 0.0
  %94 = vmatprep.subr.mxu0 0.0
  %95 = vmatpush1.msra.mxu0 0.0
  %96 = vmatprep.subr.mxu0 0.0
  %97 = vmatpush1.msra.mxu0 0.0
  %98 = vmatprep.subr.mxu0 0.0
  %99 = vmatpush1.msra.mxu0 0.0
  %100 = vmatprep.subr.mxu0 0.0
  %101 = vmatpush1.msra.mxu0 0.0
  %102 = vmatprep.subr.mxu0 0.0
  %103 = vmatpush1.msra.mxu0 0.0
  %104 = vmatprep.subr.mxu0 0.0
  %105 = vmatpush1.msra.mxu0 0.0
  %106 = vmatprep.subr.mxu0 0.0
  %107 = vmatpush1.msra.mxu0 0.0
  %108 = vmatprep.subr.mxu0 0.0
  %109 = vmatpush1.msra.mxu0 0.0
  %110 = vmatprep.subr.mxu0 0.0
  %111 = vmatpush1.msra.mxu0 0.0
  %112 = vmatprep.subr.mxu0 0.0
  %113 = vmatpush1.msra.mxu0 0.0
  %114 = vmatprep.subr.mxu0 0.0
  %115 = vmatpush1.msra.mxu0 0.0
  %116 = vmatprep.subr.mxu0 0.0
  %117 = vmatpush1.msra.mxu0 0.0
  %118 = vmatprep.subr.mxu0 0.0
  %119 = vmatpush1.msra.mxu0 0.0
  %120 = vmatprep.subr.mxu0 0.0
  %121 = vmatpush1.msra.mxu0 0.0
  %122 = vmatprep.mubr.f32.mxu0 0.0
  %123 = vmatmul.mubr.f32.gmra.mrb[0].mxu0 %v53
  %v124 = vpop.f32.mrb[0].mxu0
  %v125 = vadd.f32 %v44, %v124
  %v126 = vpop.f32.mrb[0].mxu0
  %v127 = vadd.f32 %v48, %v126
  %128 = vmatprep.mubr.f32.mxu0 0.0
  %129 = vmatmul.mubr.f32.gmra.mrb[0].mxu0 %v56
  %v130 = vpop.f32.mrb[0].mxu0
  %v131 = vadd.f32 %v44, %v130
  %v132 = vpop.f32.mrb[0].mxu0
  %v133 = vadd.f32 %v48, %v132
  %134 = vdwg.mxu0
  %v135 = vld [vmem:[%s3] sm:$0xff]
  %v136 = vld [vmem:[%s3 + $0x8] sm:$0xff]
  %v137 = vld [vmem:[%s3 + $0x10] sm:$0xff]
  %v138 = vld [vmem:[%s3 + $0x18] sm:$0xff]
  %v139 = vld [vmem:[%s4] sm:$0xff]
  %v140 = vld [vmem:[%s4 + $0x8] sm:$0xff]
  %v141 = vld [vmem:[%s4 + $0x10] sm:$0xff]
  %v142 = vld [vmem:[%s4 + $0x18] sm:$0xff]
  %v144 = vsel %vm51, 0.0, 0
  %146 = vmatprep.subr.mxu0 0.0
  %147 = vmatpush1.msra.mxu0 %v135
  %148 = vmatprep.subr.mxu0 0.0
  %149 = vmatpush1.msra.mxu0 %v136
  %150 = vmatprep.subr.mxu0 0.0
  %151 = vmatpush1.msra.mxu0 %v137
  %152 = vmatprep.subr.mxu0 0.0
  %153 = vmatpush1.msra.mxu0 %v138
  %154 = vmatprep.subr.mxu0 0.0
  %155 = vmatpush1.msra.mxu0 0.0
  %156 = vmatprep.subr.mxu0 0.0
  %157 = vmatpush1.msra.mxu0 0.0
  %158 = vmatprep.subr.mxu0 0.0
  %159 = vmatpush1.msra.mxu0 0.0
  %160 = vmatprep.subr.mxu0 0.0
  %161 = vmatpush1.msra.mxu0 0.0
  %162 = vmatprep.subr.mxu0 0.0
  %163 = vmatpush1.msra.mxu0 0.0
  %164 = vmatprep.subr.mxu0 0.0
  %165 = vmatpush1.msra.mxu0 0.0
  %166 = vmatprep.subr.mxu0 0.0
  %167 = vmatpush1.msra.mxu0 0.0
  %168 = vmatprep.subr.mxu0 0.0
  %169 = vmatpush1.msra.mxu0 0.0
  %170 = vmatprep.subr.mxu0 0.0
  %171 = vmatpush1.msra.mxu0 0.0
  %172 = vmatprep.subr.mxu0 0.0
  %173 = vmatpush1.msra.mxu0 0.0
  %174 = vmatprep.subr.mxu0 0.0
  %175 = vmatpush1.msra.mxu0 0.0
  %176 = vmatprep.subr.mxu0 0.0
  %177 = vmatpush1.msra.mxu0 0.0
  %178 = vmatprep.subr.mxu0 0.0
  %179 = vmatpush1.msra.mxu0 0.0
  %180 = vmatprep.subr.mxu0 0.0
  %181 = vmatpush1.msra.mxu0 0.0
  %182 = vmatprep.subr.mxu0 0.0
  %183 = vmatpush1.msra.mxu0 0.0
  %184 = vmatprep.subr.mxu0 0.0
  %185 = vmatpush1.msra.mxu0 0.0
  %186 = vmatprep.subr.mxu0 0.0
  %187 = vmatpush1.msra.mxu0 0.0
  %188 = vmatprep.subr.mxu0 0.0
  %189 = vmatpush1.msra.mxu0 0.0
  %190 = vmatprep.subr.mxu0 0.0
  %191 = vmatpush1.msra.mxu0 0.0
  %192 = vmatprep.subr.mxu0 0.0
  %193 = vmatpush1.msra.mxu0 0.0
  %194 = vmatprep.subr.mxu0 0.0
  %195 = vmatpush1.msra.mxu0 0.0
  %196 = vmatprep.subr.mxu0 0.0
  %197 = vmatpush1.msra.mxu0 0.0
  %198 = vmatprep.subr.mxu0 0.0
  %199 = vmatpush1.msra.mxu0 0.0
  %200 = vmatprep.subr.mxu0 0.0
  %201 = vmatpush1.msra.mxu0 0.0
  %202 = vmatprep.subr.mxu0 0.0
  %203 = vmatpush1.msra.mxu0 0.0
  %204 = vmatprep.subr.mxu0 0.0
  %205 = vmatpush1.msra.mxu0 0.0
  %206 = vmatprep.subr.mxu0 0.0
  %207 = vmatpush1.msra.mxu0 0.0
  %208 = vmatprep.subr.mxu0 0.0
  %209 = vmatpush1.msra.mxu0 0.0
  %210 = vmatprep.mubr.f32.mxu0 0.0
  %211 = vmatmul.mubr.f32.gmra.mrb[0].mxu0 %v144
  %v212 = vpop.f32.mrb[0].mxu0
  %v213 = vadd.f32 0.0, %v212
  %v214 = vpop.f32.mrb[0].mxu0
  %215 = vdwg.mxu0
  %v216 = vadd.f32 %v125, %v213
  %v217 = vxor.u32 %v216, 2147483648
  %v218 = vmul.f32 %v217, 1.442695
  %v219 = vpow.pop %v218
  %v220 = vadd.f32 %v219, 1.0
  %v221 = vrcp.pop %v220
  %v222 = vmul.f32 1.0, %v221
  %v223 = vtanh.pop %v216
  %v224 = vmul.f32 %v222, 0.0
  %226 = vrot.lane.b32.xlu0 %v223, 32
  %v227 = vpop.permute.xlu0 %226
  %v229 = vmul.f32 %v222, %v227
  %231 = vrot.lane.b32.xlu0 %v229, 32
  %v232 = vpop.permute.xlu0 %231
  %v234 = vadd.f32 %v224, %v232
  %v235 = vtanh.pop %v234
  %237 = vrot.lane.b32.xlu0 %v235, 32
  %v238 = vpop.permute.xlu0 %237
  %v240 = vmul.f32 %v222, %v238
  %241 = vmatprep.subr.mxu0 0.0
  %242 = vmatpush1.msra.mxu0 %v139
  %243 = vmatprep.subr.mxu0 0.0
  %244 = vmatpush1.msra.mxu0 %v140
  %245 = vmatprep.subr.mxu0 0.0
  %246 = vmatpush1.msra.mxu0 %v141
  %247 = vmatprep.subr.mxu0 0.0
  %248 = vmatpush1.msra.mxu0 %v142
  %249 = vmatprep.subr.mxu0 0.0
  %250 = vmatpush1.msra.mxu0 0.0
  %251 = vmatprep.subr.mxu0 0.0
  %252 = vmatpush1.msra.mxu0 0.0
  %253 = vmatprep.subr.mxu0 0.0
  %254 = vmatpush1.msra.mxu0 0.0
  %255 = vmatprep.subr.mxu0 0.0
  %256 = vmatpush1.msra.mxu0 0.0
  %257 = vmatprep.subr.mxu0 0.0
  %258 = vmatpush1.msra.mxu0 0.0
  %259 = vmatprep.subr.mxu0 0.0
  %260 = vmatpush1.msra.mxu0 0.0
  %261 = vmatprep.subr.mxu0 0.0
  %262 = vmatpush1.msra.mxu0 0.0
  %263 = vmatprep.subr.mxu0 0.0
  %264 = vmatpush1.msra.mxu0 0.0
  %265 = vmatprep.subr.mxu0 0.0
  %266 = vmatpush1.msra.mxu0 0.0
  %267 = vmatprep.subr.mxu0 0.0
  %268 = vmatpush1.msra.mxu0 0.0
  %269 = vmatprep.subr.mxu0 0.0
  %270 = vmatpush1.msra.mxu0 0.0
  %271 = vmatprep.subr.mxu0 0.0
  %272 = vmatpush1.msra.mxu0 0.0
  %273 = vmatprep.subr.mxu0 0.0
  %274 = vmatpush1.msra.mxu0 0.0
  %275 = vmatprep.subr.mxu0 0.0
  %276 = vmatpush1.msra.mxu0 0.0
  %277 = vmatprep.subr.mxu0 0.0
  %278 = vmatpush1.msra.mxu0 0.0
  %279 = vmatprep.subr.mxu0 0.0
  %280 = vmatpush1.msra.mxu0 0.0
  %281 = vmatprep.subr.mxu0 0.0
  %282 = vmatpush1.msra.mxu0 0.0
  %283 = vmatprep.subr.mxu0 0.0
  %284 = vmatpush1.msra.mxu0 0.0
  %285 = vmatprep.subr.mxu0 0.0
  %286 = vmatpush1.msra.mxu0 0.0
  %287 = vmatprep.subr.mxu0 0.0
  %288 = vmatpush1.msra.mxu0 0.0
  %289 = vmatprep.subr.mxu0 0.0
  %290 = vmatpush1.msra.mxu0 0.0
  %291 = vmatprep.subr.mxu0 0.0
  %292 = vmatpush1.msra.mxu0 0.0
  %293 = vmatprep.subr.mxu0 0.0
  %294 = vmatpush1.msra.mxu0 0.0
  %295 = vmatprep.subr.mxu0 0.0
  %296 = vmatpush1.msra.mxu0 0.0
  %297 = vmatprep.subr.mxu0 0.0
  %298 = vmatpush1.msra.mxu0 0.0
  %299 = vmatprep.subr.mxu0 0.0
  %300 = vmatpush1.msra.mxu0 0.0
  %301 = vmatprep.subr.mxu0 0.0
  %302 = vmatpush1.msra.mxu0 0.0
  %303 = vmatprep.subr.mxu0 0.0
  %304 = vmatpush1.msra.mxu0 0.0
  %305 = vmatprep.mubr.f32.mxu0 0.0
  %306 = vmatmul.mubr.f32.gmra.mrb[0].mxu0 %v144
  %v307 = vpop.f32.mrb[0].mxu0
  %v308 = vadd.f32 0.0, %v307
  %v309 = vpop.f32.mrb[0].mxu0
  %310 = vdwg.mxu0
  %v312 = vrot.slane %v308, 2
  %v314 = vadd.f32 %v133, %v312
  %v315 = vxor.u32 %v314, 2147483648
  %v316 = vmul.f32 %v315, 1.442695
  %v317 = vpow.pop %v316
  %v318 = vadd.f32 %v317, 1.0
  %v319 = vrcp.pop %v318
  %v320 = vmul.f32 1.0, %v319
  %v321 = vtanh.pop %v314
  %v322 = vmul.f32 %v320, 0.0
  %324 = vrot.lane.b32.xlu0 %v321, 32
  %v325 = vpop.permute.xlu0 %324
  %v327 = vmul.f32 %v320, %v325
  %329 = vrot.lane.b32.xlu0 %v327, 32
  %v330 = vpop.permute.xlu0 %329
  %v332 = vadd.f32 %v322, %v330
  %v333 = vtanh.pop %v332
  %335 = vrot.lane.b32.xlu0 %v333, 32
  %v336 = vpop.permute.xlu0 %335
  %v338 = vmul.f32 %v320, %v336
  %340 = vrot.lane.b32.xlu0 %v240, 64
  %v341 = vpop.permute.xlu0 %340
  %vm343 = vcmask 254976
  %344 = vst.msk [vmem:[#allocation2] sm:$0x3] %vm343, %v341
  %346 = vrot.lane.b32.xlu0 %v338, 64
  %v347 = vpop.permute.xlu0 %346
  %s349 = scalar_lea.vmem [#allocation3], 14
  %vm350 = vcmask 261126
  %351 = vst.msk [vmem:[%s349 - $0x6] sm:$0xc0] %vm350, %v347
  %v352 = vsel %vm51, %v341, 0
  %354 = vmatprep.subr.mxu0 0.0
  %355 = vmatpush1.msra.mxu0 %v135
  %356 = vmatprep.subr.mxu0 0.0
  %357 = vmatpush1.msra.mxu0 %v136
  %358 = vmatprep.subr.mxu0 0.0
  %359 = vmatpush1.msra.mxu0 %v137
  %360 = vmatprep.subr.mxu0 0.0
  %361 = vmatpush1.msra.mxu0 %v138
  %362 = vmatprep.subr.mxu0 0.0
  %363 = vmatpush1.msra.mxu0 0.0
  %364 = vmatprep.subr.mxu0 0.0
  %365 = vmatpush1.msra.mxu0 0.0
  %366 = vmatprep.subr.mxu0 0.0
  %367 = vmatpush1.msra.mxu0 0.0
  %368 = vmatprep.subr.mxu0 0.0
  %369 = vmatpush1.msra.mxu0 0.0
  %370 = vmatprep.subr.mxu0 0.0
  %371 = vmatpush1.msra.mxu0 0.0
  %372 = vmatprep.subr.mxu0 0.0
  %373 = vmatpush1.msra.mxu0 0.0
  %374 = vmatprep.subr.mxu0 0.0
  %375 = vmatpush1.msra.mxu0 0.0
  %376 = vmatprep.subr.mxu0 0.0
  %377 = vmatpush1.msra.mxu0 0.0
  %378 = vmatprep.subr.mxu0 0.0
  %379 = vmatpush1.msra.mxu0 0.0
  %380 = vmatprep.subr.mxu0 0.0
  %381 = vmatpush1.msra.mxu0 0.0
  %382 = vmatprep.subr.mxu0 0.0
  %383 = vmatpush1.msra.mxu0 0.0
  %384 = vmatprep.subr.mxu0 0.0
  %385 = vmatpush1.msra.mxu0 0.0
  %386 = vmatprep.subr.mxu0 0.0
  %387 = vmatpush1.msra.mxu0 0.0
  %388 = vmatprep.subr.mxu0 0.0
  %389 = vmatpush1.msra.mxu0 0.0
  %390 = vmatprep.subr.mxu0 0.0
  %391 = vmatpush1.msra.mxu0 0.0
  %392 = vmatprep.subr.mxu0 0.0
  %393 = vmatpush1.msra.mxu0 0.0
  %394 = vmatprep.subr.mxu0 0.0
  %395 = vmatpush1.msra.mxu0 0.0
  %396 = vmatprep.subr.mxu0 0.0
  %397 = vmatpush1.msra.mxu0 0.0
  %398 = vmatprep.subr.mxu0 0.0
  %399 = vmatpush1.msra.mxu0 0.0
  %400 = vmatprep.subr.mxu0 0.0
  %401 = vmatpush1.msra.mxu0 0.0
  %402 = vmatprep.subr.mxu0 0.0
  %403 = vmatpush1.msra.mxu0 0.0
  %404 = vmatprep.subr.mxu0 0.0
  %405 = vmatpush1.msra.mxu0 0.0
  %406 = vmatprep.subr.mxu0 0.0
  %407 = vmatpush1.msra.mxu0 0.0
  %408 = vmatprep.subr.mxu0 0.0
  %409 = vmatpush1.msra.mxu0 0.0
  %410 = vmatprep.subr.mxu0 0.0
  %411 = vmatpush1.msra.mxu0 0.0
  %412 = vmatprep.subr.mxu0 0.0
  %413 = vmatpush1.msra.mxu0 0.0
  %414 = vmatprep.subr.mxu0 0.0
  %415 = vmatpush1.msra.mxu0 0.0
  %416 = vmatprep.subr.mxu0 0.0
  %417 = vmatpush1.msra.mxu0 0.0
  %418 = vmatprep.mubr.f32.mxu0 0.0
  %419 = vmatmul.mubr.f32.gmra.mrb[0].mxu0 %v352
  %v420 = vpop.f32.mrb[0].mxu0
  %v421 = vadd.f32 0.0, %v420
  %v422 = vpop.f32.mrb[0].mxu0
  %423 = vdwg.mxu0
  %v425 = vrot.slane %v421, 6
  %v427 = vadd.f32 %v125, %v425
  %v428 = vxor.u32 %v427, 2147483648
  %v429 = vmul.f32 %v428, 1.442695
  %v430 = vpow.pop %v429
  %v431 = vadd.f32 %v430, 1.0
  %v432 = vrcp.pop %v431
  %v433 = vmul.f32 1.0, %v432
  %v434 = vtanh.pop %v427
  %v436 = vrot.slane %v234, 6
  %v438 = vmul.f32 %v433, %v436
  %440 = vrot.lane.b32.xlu0 %v434, 32
  %v441 = vpop.permute.xlu0 %440
  %v443 = vmul.f32 %v433, %v441
  %445 = vrot.lane.b32.xlu0 %v443, 32
  %v446 = vpop.permute.xlu0 %445
  %v448 = vadd.f32 %v438, %v446
  %v449 = vtanh.pop %v448
  %451 = vrot.lane.b32.xlu0 %v449, 32
  %v452 = vpop.permute.xlu0 %451
  %v454 = vmul.f32 %v433, %v452
  %v455 = vrot.slane %v338, 6
  %456 = vrot.lane.b32.xlu0 %v455, 64
  %v457 = vpop.permute.xlu0 %456
  %v458 = vsel %vm51, %v457, 0
  %460 = vmatprep.subr.mxu0 0.0
  %461 = vmatpush1.msra.mxu0 %v139
  %462 = vmatprep.subr.mxu0 0.0
  %463 = vmatpush1.msra.mxu0 %v140
  %464 = vmatprep.subr.mxu0 0.0
  %465 = vmatpush1.msra.mxu0 %v141
  %466 = vmatprep.subr.mxu0 0.0
  %467 = vmatpush1.msra.mxu0 %v142
  %468 = vmatprep.subr.mxu0 0.0
  %469 = vmatpush1.msra.mxu0 0.0
  %470 = vmatprep.subr.mxu0 0.0
  %471 = vmatpush1.msra.mxu0 0.0
  %472 = vmatprep.subr.mxu0 0.0
  %473 = vmatpush1.msra.mxu0 0.0
  %474 = vmatprep.subr.mxu0 0.0
  %475 = vmatpush1.msra.mxu0 0.0
  %476 = vmatprep.subr.mxu0 0.0
  %477 = vmatpush1.msra.mxu0 0.0
  %478 = vmatprep.subr.mxu0 0.0
  %479 = vmatpush1.msra.mxu0 0.0
  %480 = vmatprep.subr.mxu0 0.0
  %481 = vmatpush1.msra.mxu0 0.0
  %482 = vmatprep.subr.mxu0 0.0
  %483 = vmatpush1.msra.mxu0 0.0
  %484 = vmatprep.subr.mxu0 0.0
  %485 = vmatpush1.msra.mxu0 0.0
  %486 = vmatprep.subr.mxu0 0.0
  %487 = vmatpush1.msra.mxu0 0.0
  %488 = vmatprep.subr.mxu0 0.0
  %489 = vmatpush1.msra.mxu0 0.0
  %490 = vmatprep.subr.mxu0 0.0
  %491 = vmatpush1.msra.mxu0 0.0
  %492 = vmatprep.subr.mxu0 0.0
  %493 = vmatpush1.msra.mxu0 0.0
  %494 = vmatprep.subr.mxu0 0.0
  %495 = vmatpush1.msra.mxu0 0.0
  %496 = vmatprep.subr.mxu0 0.0
  %497 = vmatpush1.msra.mxu0 0.0
  %498 = vmatprep.subr.mxu0 0.0
  %499 = vmatpush1.msra.mxu0 0.0
  %500 = vmatprep.subr.mxu0 0.0
  %501 = vmatpush1.msra.mxu0 0.0
  %502 = vmatprep.subr.mxu0 0.0
  %503 = vmatpush1.msra.mxu0 0.0
  %504 = vmatprep.subr.mxu0 0.0
  %505 = vmatpush1.msra.mxu0 0.0
  %506 = vmatprep.subr.mxu0 0.0
  %507 = vmatpush1.msra.mxu0 0.0
  %508 = vmatprep.subr.mxu0 0.0
  %509 = vmatpush1.msra.mxu0 0.0
  %510 = vmatprep.subr.mxu0 0.0
  %511 = vmatpush1.msra.mxu0 0.0
  %512 = vmatprep.subr.mxu0 0.0
  %513 = vmatpush1.msra.mxu0 0.0
  %514 = vmatprep.subr.mxu0 0.0
  %515 = vmatpush1.msra.mxu0 0.0
  %516 = vmatprep.subr.mxu0 0.0
  %517 = vmatpush1.msra.mxu0 0.0
  %518 = vmatprep.subr.mxu0 0.0
  %519 = vmatpush1.msra.mxu0 0.0
  %520 = vmatprep.subr.mxu0 0.0
  %521 = vmatpush1.msra.mxu0 0.0
  %522 = vmatprep.subr.mxu0 0.0
  %523 = vmatpush1.msra.mxu0 0.0
  %524 = vmatprep.mubr.f32.mxu0 0.0
  %525 = vmatmul.mubr.f32.gmra.mrb[0].mxu0 %v458
  %v526 = vpop.f32.mrb[0].mxu0
  %v527 = vadd.f32 0.0, %v526
  %v528 = vpop.f32.mrb[0].mxu0
  %529 = vdwg.mxu0
  %v531 = vrot.slane %v527, 4
  %v533 = vadd.f32 %v133, %v531
  %v534 = vxor.u32 %v533, 2147483648
  %v535 = vmul.f32 %v534, 1.442695
  %v536 = vpow.pop %v535
  %v537 = vadd.f32 %v536, 1.0
  %v538 = vrcp.pop %v537
  %v539 = vmul.f32 1.0, %v538
  %v540 = vtanh.pop %v533
  %v542 = vrot.slane %v332, 2
  %v544 = vmul.f32 %v539, %v542
  %546 = vrot.lane.b32.xlu0 %v540, 32
  %v547 = vpop.permute.xlu0 %546
  %v549 = vmul.f32 %v539, %v547
  %551 = vrot.lane.b32.xlu0 %v549, 32
  %v552 = vpop.permute.xlu0 %551
  %v554 = vadd.f32 %v544, %v552
  %v555 = vtanh.pop %v554
  %557 = vrot.lane.b32.xlu0 %v555, 32
  %v558 = vpop.permute.xlu0 %557
  %v560 = vmul.f32 %v539, %v558
  %562 = vrot.lane.b32.xlu0 %v454, 64
  %v563 = vpop.permute.xlu0 %562
  %s565 = scalar_lea.vmem [#allocation2], 2
  %vm566 = vcmask 257026
  %567 = vst.msk [vmem:[%s565 - $0x2] sm:$0xc] %vm566, %v563
  %569 = vrot.lane.b32.xlu0 %v560, 64
  %v570 = vpop.permute.xlu0 %569
  %s572 = scalar_lea.vmem [#allocation3], 12
  %vm573 = vcmask 259076
  %574 = vst.msk [vmem:[%s572 - $0x4] sm:$0x30] %vm573, %v570
  %v575 = vrot.slane %v454, 2
  %576 = vrot.lane.b32.xlu0 %v575, 64
  %v577 = vpop.permute.xlu0 %576
  %v578 = vsel %vm51, %v577, 0
  %580 = vmatprep.subr.mxu0 0.0
  %581 = vmatpush1.msra.mxu0 %v135
  %582 = vmatprep.subr.mxu0 0.0
  %583 = vmatpush1.msra.mxu0 %v136
  %584 = vmatprep.subr.mxu0 0.0
  %585 = vmatpush1.msra.mxu0 %v137
  %586 = vmatprep.subr.mxu0 0.0
  %587 = vmatpush1.msra.mxu0 %v138
  %588 = vmatprep.subr.mxu0 0.0
  %589 = vmatpush1.msra.mxu0 0.0
  %590 = vmatprep.subr.mxu0 0.0
  %591 = vmatpush1.msra.mxu0 0.0
  %592 = vmatprep.subr.mxu0 0.0
  %593 = vmatpush1.msra.mxu0 0.0
  %594 = vmatprep.subr.mxu0 0.0
  %595 = vmatpush1.msra.mxu0 0.0
  %596 = vmatprep.subr.mxu0 0.0
  %597 = vmatpush1.msra.mxu0 0.0
  %598 = vmatprep.subr.mxu0 0.0
  %599 = vmatpush1.msra.mxu0 0.0
  %600 = vmatprep.subr.mxu0 0.0
  %601 = vmatpush1.msra.mxu0 0.0
  %602 = vmatprep.subr.mxu0 0.0
  %603 = vmatpush1.msra.mxu0 0.0
  %604 = vmatprep.subr.mxu0 0.0
  %605 = vmatpush1.msra.mxu0 0.0
  %606 = vmatprep.subr.mxu0 0.0
  %607 = vmatpush1.msra.mxu0 0.0
  %608 = vmatprep.subr.mxu0 0.0
  %609 = vmatpush1.msra.mxu0 0.0
  %610 = vmatprep.subr.mxu0 0.0
  %611 = vmatpush1.msra.mxu0 0.0
  %612 = vmatprep.subr.mxu0 0.0
  %613 = vmatpush1.msra.mxu0 0.0
  %614 = vmatprep.subr.mxu0 0.0
  %615 = vmatpush1.msra.mxu0 0.0
  %616 = vmatprep.subr.mxu0 0.0
  %617 = vmatpush1.msra.mxu0 0.0
  %618 = vmatprep.subr.mxu0 0.0
  %619 = vmatpush1.msra.mxu0 0.0
  %620 = vmatprep.subr.mxu0 0.0
  %621 = vmatpush1.msra.mxu0 0.0
  %622 = vmatprep.subr.mxu0 0.0
  %623 = vmatpush1.msra.mxu0 0.0
  %624 = vmatprep.subr.mxu0 0.0
  %625 = vmatpush1.msra.mxu0 0.0
  %626 = vmatprep.subr.mxu0 0.0
  %627 = vmatpush1.msra.mxu0 0.0
  %628 = vmatprep.subr.mxu0 0.0
  %629 = vmatpush1.msra.mxu0 0.0
  %630 = vmatprep.subr.mxu0 0.0
  %631 = vmatpush1.msra.mxu0 0.0
  %632 = vmatprep.subr.mxu0 0.0
  %633 = vmatpush1.msra.mxu0 0.0
  %634 = vmatprep.subr.mxu0 0.0
  %635 = vmatpush1.msra.mxu0 0.0
  %636 = vmatprep.subr.mxu0 0.0
  %637 = vmatpush1.msra.mxu0 0.0
  %638 = vmatprep.subr.mxu0 0.0
  %639 = vmatpush1.msra.mxu0 0.0
  %640 = vmatprep.subr.mxu0 0.0
  %641 = vmatpush1.msra.mxu0 0.0
  %642 = vmatprep.subr.mxu0 0.0
  %643 = vmatpush1.msra.mxu0 0.0
  %644 = vmatprep.mubr.f32.mxu0 0.0
  %645 = vmatmul.mubr.f32.gmra.mrb[0].mxu0 %v578
  %v646 = vpop.f32.mrb[0].mxu0
  %v647 = vadd.f32 0.0, %v646
  %v648 = vpop.f32.mrb[0].mxu0
  %649 = vdwg.mxu0
  %v651 = vrot.slane %v647, 4
  %v653 = vadd.f32 %v125, %v651
  %v654 = vxor.u32 %v653, 2147483648
  %v655 = vmul.f32 %v654, 1.442695
  %v656 = vpow.pop %v655
  %v657 = vadd.f32 %v656, 1.0
  %v658 = vrcp.pop %v657
  %v659 = vmul.f32 1.0, %v658
  %v660 = vtanh.pop %v653
  %v662 = vrot.slane %v448, 6
  %v664 = vmul.f32 %v659, %v662
  %666 = vrot.lane.b32.xlu0 %v660, 32
  %v667 = vpop.permute.xlu0 %666
  %v669 = vmul.f32 %v659, %v667
  %671 = vrot.lane.b32.xlu0 %v669, 32
  %v672 = vpop.permute.xlu0 %671
  %v674 = vadd.f32 %v664, %v672
  %v675 = vtanh.pop %v674
  %677 = vrot.lane.b32.xlu0 %v675, 32
  %v678 = vpop.permute.xlu0 %677
  %v680 = vmul.f32 %v659, %v678
  %v681 = vrot.slane %v560, 4
  %682 = vrot.lane.b32.xlu0 %v681, 64
  %v683 = vpop.permute.xlu0 %682
  %v684 = vsel %vm51, %v683, 0
  %686 = vmatprep.subr.mxu0 0.0
  %687 = vmatpush1.msra.mxu0 %v139
  %688 = vmatprep.subr.mxu0 0.0
  %689 = vmatpush1.msra.mxu0 %v140
  %690 = vmatprep.subr.mxu0 0.0
  %691 = vmatpush1.msra.mxu0 %v141
  %692 = vmatprep.subr.mxu0 0.0
  %693 = vmatpush1.msra.mxu0 %v142
  %694 = vmatprep.subr.mxu0 0.0
  %695 = vmatpush1.msra.mxu0 0.0
  %696 = vmatprep.subr.mxu0 0.0
  %697 = vmatpush1.msra.mxu0 0.0
  %698 = vmatprep.subr.mxu0 0.0
  %699 = vmatpush1.msra.mxu0 0.0
  %700 = vmatprep.subr.mxu0 0.0
  %701 = vmatpush1.msra.mxu0 0.0
  %702 = vmatprep.subr.mxu0 0.0
  %703 = vmatpush1.msra.mxu0 0.0
  %704 = vmatprep.subr.mxu0 0.0
  %705 = vmatpush1.msra.mxu0 0.0
  %706 = vmatprep.subr.mxu0 0.0
  %707 = vmatpush1.msra.mxu0 0.0
  %708 = vmatprep.subr.mxu0 0.0
  %709 = vmatpush1.msra.mxu0 0.0
  %710 = vmatprep.subr.mxu0 0.0
  %711 = vmatpush1.msra.mxu0 0.0
  %712 = vmatprep.subr.mxu0 0.0
  %713 = vmatpush1.msra.mxu0 0.0
  %714 = vmatprep.subr.mxu0 0.0
  %715 = vmatpush1.msra.mxu0 0.0
  %716 = vmatprep.subr.mxu0 0.0
  %717 = vmatpush1.msra.mxu0 0.0
  %718 = vmatprep.subr.mxu0 0.0
  %719 = vmatpush1.msra.mxu0 0.0
  %720 = vmatprep.subr.mxu0 0.0
  %721 = vmatpush1.msra.mxu0 0.0
  %722 = vmatprep.subr.mxu0 0.0
  %723 = vmatpush1.msra.mxu0 0.0
  %724 = vmatprep.subr.mxu0 0.0
  %725 = vmatpush1.msra.mxu0 0.0
  %726 = vmatprep.subr.mxu0 0.0
  %727 = vmatpush1.msra.mxu0 0.0
  %728 = vmatprep.subr.mxu0 0.0
  %729 = vmatpush1.msra.mxu0 0.0
  %730 = vmatprep.subr.mxu0 0.0
  %731 = vmatpush1.msra.mxu0 0.0
  %732 = vmatprep.subr.mxu0 0.0
  %733 = vmatpush1.msra.mxu0 0.0
  %734 = vmatprep.subr.mxu0 0.0
  %735 = vmatpush1.msra.mxu0 0.0
  %736 = vmatprep.subr.mxu0 0.0
  %737 = vmatpush1.msra.mxu0 0.0
  %738 = vmatprep.subr.mxu0 0.0
  %739 = vmatpush1.msra.mxu0 0.0
  %740 = vmatprep.subr.mxu0 0.0
  %741 = vmatpush1.msra.mxu0 0.0
  %742 = vmatprep.subr.mxu0 0.0
  %743 = vmatpush1.msra.mxu0 0.0
  %744 = vmatprep.subr.mxu0 0.0
  %745 = vmatpush1.msra.mxu0 0.0
  %746 = vmatprep.subr.mxu0 0.0
  %747 = vmatpush1.msra.mxu0 0.0
  %748 = vmatprep.subr.mxu0 0.0
  %749 = vmatpush1.msra.mxu0 0.0
  %750 = vmatprep.mubr.f32.mxu0 0.0
  %751 = vmatmul.mubr.f32.gmra.mrb[0].mxu0 %v684
  %v752 = vpop.f32.mrb[0].mxu0
  %v753 = vadd.f32 0.0, %v752
  %v754 = vpop.f32.mrb[0].mxu0
  %755 = vdwg.mxu0
  %v757 = vrot.slane %v753, 6
  %v759 = vadd.f32 %v133, %v757
  %v760 = vxor.u32 %v759, 2147483648
  %v761 = vmul.f32 %v760, 1.442695
  %v762 = vpow.pop %v761
  %v763 = vadd.f32 %v762, 1.0
  %v764 = vrcp.pop %v763
  %v765 = vmul.f32 1.0, %v764
  %v766 = vtanh.pop %v759
  %v768 = vrot.slane %v554, 2
  %v770 = vmul.f32 %v765, %v768
  %772 = vrot.lane.b32.xlu0 %v766, 32
  %v773 = vpop.permute.xlu0 %772
  %v775 = vmul.f32 %v765, %v773
  %777 = vrot.lane.b32.xlu0 %v775, 32
  %v778 = vpop.permute.xlu0 %777
  %v780 = vadd.f32 %v770, %v778
  %v781 = vtanh.pop %v780
  %783 = vrot.lane.b32.xlu0 %v781, 32
  %v784 = vpop.permute.xlu0 %783
  %v786 = vmul.f32 %v765, %v784
  %788 = vrot.lane.b32.xlu0 %v680, 64
  %v789 = vpop.permute.xlu0 %788
  %s791 = scalar_lea.vmem [#allocation2], 4
  %792 = vst.msk [vmem:[%s791 - $0x4] sm:$0x30] %vm573, %v789
  %794 = vrot.lane.b32.xlu0 %v786, 64
  %v795 = vpop.permute.xlu0 %794
  %s797 = scalar_lea.vmem [#allocation3], 10
  %798 = vst.msk [vmem:[%s797 - $0x2] sm:$0xc] %vm566, %v795
  %v799 = vrot.slane %v680, 4
  %800 = vrot.lane.b32.xlu0 %v799, 64
  %v801 = vpop.permute.xlu0 %800
  %v802 = vsel %vm51, %v801, 0
  %804 = vmatprep.subr.mxu0 0.0
  %805 = vmatpush1.msra.mxu0 %v135
  %806 = vmatprep.subr.mxu0 0.0
  %807 = vmatpush1.msra.mxu0 %v136
  %808 = vmatprep.subr.mxu0 0.0
  %809 = vmatpush1.msra.mxu0 %v137
  %810 = vmatprep.subr.mxu0 0.0
  %811 = vmatpush1.msra.mxu0 %v138
  %812 = vmatprep.subr.mxu0 0.0
  %813 = vmatpush1.msra.mxu0 0.0
  %814 = vmatprep.subr.mxu0 0.0
  %815 = vmatpush1.msra.mxu0 0.0
  %816 = vmatprep.subr.mxu0 0.0
  %817 = vmatpush1.msra.mxu0 0.0
  %818 = vmatprep.subr.mxu0 0.0
  %819 = vmatpush1.msra.mxu0 0.0
  %820 = vmatprep.subr.mxu0 0.0
  %821 = vmatpush1.msra.mxu0 0.0
  %822 = vmatprep.subr.mxu0 0.0
  %823 = vmatpush1.msra.mxu0 0.0
  %824 = vmatprep.subr.mxu0 0.0
  %825 = vmatpush1.msra.mxu0 0.0
  %826 = vmatprep.subr.mxu0 0.0
  %827 = vmatpush1.msra.mxu0 0.0
  %828 = vmatprep.subr.mxu0 0.0
  %829 = vmatpush1.msra.mxu0 0.0
  %830 = vmatprep.subr.mxu0 0.0
  %831 = vmatpush1.msra.mxu0 0.0
  %832 = vmatprep.subr.mxu0 0.0
  %833 = vmatpush1.msra.mxu0 0.0
  %834 = vmatprep.subr.mxu0 0.0
  %835 = vmatpush1.msra.mxu0 0.0
  %836 = vmatprep.subr.mxu0 0.0
  %837 = vmatpush1.msra.mxu0 0.0
  %838 = vmatprep.subr.mxu0 0.0
  %839 = vmatpush1.msra.mxu0 0.0
  %840 = vmatprep.subr.mxu0 0.0
  %841 = vmatpush1.msra.mxu0 0.0
  %842 = vmatprep.subr.mxu0 0.0
  %843 = vmatpush1.msra.mxu0 0.0
  %844 = vmatprep.subr.mxu0 0.0
  %845 = vmatpush1.msra.mxu0 0.0
  %846 = vmatprep.subr.mxu0 0.0
  %847 = vmatpush1.msra.mxu0 0.0
  %848 = vmatprep.subr.mxu0 0.0
  %849 = vmatpush1.msra.mxu0 0.0
  %850 = vmatprep.subr.mxu0 0.0
  %851 = vmatpush1.msra.mxu0 0.0
  %852 = vmatprep.subr.mxu0 0.0
  %853 = vmatpush1.msra.mxu0 0.0
  %854 = vmatprep.subr.mxu0 0.0
  %855 = vmatpush1.msra.mxu0 0.0
  %856 = vmatprep.subr.mxu0 0.0
  %857 = vmatpush1.msra.mxu0 0.0
  %858 = vmatprep.subr.mxu0 0.0
  %859 = vmatpush1.msra.mxu0 0.0
  %860 = vmatprep.subr.mxu0 0.0
  %861 = vmatpush1.msra.mxu0 0.0
  %862 = vmatprep.subr.mxu0 0.0
  %863 = vmatpush1.msra.mxu0 0.0
  %864 = vmatprep.subr.mxu0 0.0
  %865 = vmatpush1.msra.mxu0 0.0
  %866 = vmatprep.subr.mxu0 0.0
  %867 = vmatpush1.msra.mxu0 0.0
  %868 = vmatprep.mubr.f32.mxu0 0.0
  %869 = vmatmul.mubr.f32.gmra.mrb[0].mxu0 %v802
  %v870 = vpop.f32.mrb[0].mxu0
  %v871 = vadd.f32 0.0, %v870
  %v872 = vpop.f32.mrb[0].mxu0
  %873 = vdwg.mxu0
  %v875 = vrot.slane %v871, 2
  %v877 = vadd.f32 %v125, %v875
  %v878 = vxor.u32 %v877, 2147483648
  %v879 = vmul.f32 %v878, 1.442695
  %v880 = vpow.pop %v879
  %v881 = vadd.f32 %v880, 1.0
  %v882 = vrcp.pop %v881
  %v883 = vmul.f32 1.0, %v882
  %v884 = vtanh.pop %v877
  %v886 = vrot.slane %v674, 6
  %v888 = vmul.f32 %v883, %v886
  %890 = vrot.lane.b32.xlu0 %v884, 32
  %v891 = vpop.permute.xlu0 %890
  %v893 = vmul.f32 %v883, %v891
  %895 = vrot.lane.b32.xlu0 %v893, 32
  %v896 = vpop.permute.xlu0 %895
  %v898 = vadd.f32 %v888, %v896
  %v899 = vtanh.pop %v898
  %901 = vrot.lane.b32.xlu0 %v899, 32
  %v902 = vpop.permute.xlu0 %901
  %v904 = vmul.f32 %v883, %v902
  %v905 = vrot.slane %v786, 2
  %906 = vrot.lane.b32.xlu0 %v905, 64
  %v907 = vpop.permute.xlu0 %906
  %v908 = vsel %vm51, %v907, 0
  %910 = vmatprep.subr.mxu0 0.0
  %911 = vmatpush1.msra.mxu0 %v139
  %912 = vmatprep.subr.mxu0 0.0
  %913 = vmatpush1.msra.mxu0 %v140
  %914 = vmatprep.subr.mxu0 0.0
  %915 = vmatpush1.msra.mxu0 %v141
  %916 = vmatprep.subr.mxu0 0.0
  %917 = vmatpush1.msra.mxu0 %v142
  %918 = vmatprep.subr.mxu0 0.0
  %919 = vmatpush1.msra.mxu0 0.0
  %920 = vmatprep.subr.mxu0 0.0
  %921 = vmatpush1.msra.mxu0 0.0
  %922 = vmatprep.subr.mxu0 0.0
  %923 = vmatpush1.msra.mxu0 0.0
  %924 = vmatprep.subr.mxu0 0.0
  %925 = vmatpush1.msra.mxu0 0.0
  %926 = vmatprep.subr.mxu0 0.0
  %927 = vmatpush1.msra.mxu0 0.0
  %928 = vmatprep.subr.mxu0 0.0
  %929 = vmatpush1.msra.mxu0 0.0
  %930 = vmatprep.subr.mxu0 0.0
  %931 = vmatpush1.msra.mxu0 0.0
  %932 = vmatprep.subr.mxu0 0.0
  %933 = vmatpush1.msra.mxu0 0.0
  %934 = vmatprep.subr.mxu0 0.0
  %935 = vmatpush1.msra.mxu0 0.0
  %936 = vmatprep.subr.mxu0 0.0
  %937 = vmatpush1.msra.mxu0 0.0
  %938 = vmatprep.subr.mxu0 0.0
  %939 = vmatpush1.msra.mxu0 0.0
  %940 = vmatprep.subr.mxu0 0.0
  %941 = vmatpush1.msra.mxu0 0.0
  %942 = vmatprep.subr.mxu0 0.0
  %943 = vmatpush1.msra.mxu0 0.0
  %944 = vmatprep.subr.mxu0 0.0
  %945 = vmatpush1.msra.mxu0 0.0
  %946 = vmatprep.subr.mxu0 0.0
  %947 = vmatpush1.msra.mxu0 0.0
  %948 = vmatprep.subr.mxu0 0.0
  %949 = vmatpush1.msra.mxu0 0.0
  %950 = vmatprep.subr.mxu0 0.0
  %951 = vmatpush1.msra.mxu0 0.0
  %952 = vmatprep.subr.mxu0 0.0
  %953 = vmatpush1.msra.mxu0 0.0
  %954 = vmatprep.subr.mxu0 0.0
  %955 = vmatpush1.msra.mxu0 0.0
  %956 = vmatprep.subr.mxu0 0.0
  %957 = vmatpush1.msra.mxu0 0.0
  %958 = vmatprep.subr.mxu0 0.0
  %959 = vmatpush1.msra.mxu0 0.0
  %960 = vmatprep.subr.mxu0 0.0
  %961 = vmatpush1.msra.mxu0 0.0
  %962 = vmatprep.subr.mxu0 0.0
  %963 = vmatpush1.msra.mxu0 0.0
  %964 = vmatprep.subr.mxu0 0.0
  %965 = vmatpush1.msra.mxu0 0.0
  %966 = vmatprep.subr.mxu0 0.0
  %967 = vmatpush1.msra.mxu0 0.0
  %968 = vmatprep.subr.mxu0 0.0
  %969 = vmatpush1.msra.mxu0 0.0
  %970 = vmatprep.subr.mxu0 0.0
  %971 = vmatpush1.msra.mxu0 0.0
  %972 = vmatprep.subr.mxu0 0.0
  %973 = vmatpush1.msra.mxu0 0.0
  %974 = vmatprep.mubr.f32.mxu0 0.0
  %975 = vmatmul.mubr.f32.gmra.mrb[0].mxu0 %v908
  %v976 = vpop.f32.mrb[0].mxu0
  %v977 = vadd.f32 0.0, %v976
  %v978 = vpop.f32.mrb[0].mxu0
  %979 = vdwg.mxu0
  %v980 = vadd.f32 %v133, %v977
  %v981 = vxor.u32 %v980, 2147483648
  %v982 = vmul.f32 %v981, 1.442695
  %v983 = vpow.pop %v982
  %v984 = vadd.f32 %v983, 1.0
  %v985 = vrcp.pop %v984
  %v986 = vmul.f32 1.0, %v985
  %v987 = vtanh.pop %v980
  %v989 = vrot.slane %v780, 2
  %v991 = vmul.f32 %v986, %v989
  %993 = vrot.lane.b32.xlu0 %v987, 32
  %v994 = vpop.permute.xlu0 %993
  %v996 = vmul.f32 %v986, %v994
  %998 = vrot.lane.b32.xlu0 %v996, 32
  %v999 = vpop.permute.xlu0 %998
  %v1001 = vadd.f32 %v991, %v999
  %v1002 = vtanh.pop %v1001
  %1004 = vrot.lane.b32.xlu0 %v1002, 32
  %v1005 = vpop.permute.xlu0 %1004
  %v1007 = vmul.f32 %v986, %v1005
  %1009 = vrot.lane.b32.xlu0 %v904, 64
  %v1010 = vpop.permute.xlu0 %1009
  %s1012 = scalar_lea.vmem [#allocation2], 6
  %1013 = vst.msk [vmem:[%s1012 - $0x6] sm:$0xc0] %vm350, %v1010
  %1015 = vrot.lane.b32.xlu0 %v1007, 64
  %v1016 = vpop.permute.xlu0 %1015
  %s1018 = scalar_lea.vmem [#allocation3], 8
  %1019 = vst.msk [vmem:[%s1018] sm:$0x3] %vm343, %v1016
  %v1020 = vrot.slane %v904, 6
  %1021 = vrot.lane.b32.xlu0 %v1020, 64
  %v1022 = vpop.permute.xlu0 %1021
  %v1023 = vsel %vm51, %v1022, 0
  %1025 = vmatprep.subr.mxu0 0.0
  %1026 = vmatpush1.msra.mxu0 %v135
  %1027 = vmatprep.subr.mxu0 0.0
  %1028 = vmatpush1.msra.mxu0 %v136
  %1029 = vmatprep.subr.mxu0 0.0
  %1030 = vmatpush1.msra.mxu0 %v137
  %1031 = vmatprep.subr.mxu0 0.0
  %1032 = vmatpush1.msra.mxu0 %v138
  %1033 = vmatprep.subr.mxu0 0.0
  %1034 = vmatpush1.msra.mxu0 0.0
  %1035 = vmatprep.subr.mxu0 0.0
  %1036 = vmatpush1.msra.mxu0 0.0
  %1037 = vmatprep.subr.mxu0 0.0
  %1038 = vmatpush1.msra.mxu0 0.0
  %1039 = vmatprep.subr.mxu0 0.0
  %1040 = vmatpush1.msra.mxu0 0.0
  %1041 = vmatprep.subr.mxu0 0.0
  %1042 = vmatpush1.msra.mxu0 0.0
  %1043 = vmatprep.subr.mxu0 0.0
  %1044 = vmatpush1.msra.mxu0 0.0
  %1045 = vmatprep.subr.mxu0 0.0
  %1046 = vmatpush1.msra.mxu0 0.0
  %1047 = vmatprep.subr.mxu0 0.0
  %1048 = vmatpush1.msra.mxu0 0.0
  %1049 = vmatprep.subr.mxu0 0.0
  %1050 = vmatpush1.msra.mxu0 0.0
  %1051 = vmatprep.subr.mxu0 0.0
  %1052 = vmatpush1.msra.mxu0 0.0
  %1053 = vmatprep.subr.mxu0 0.0
  %1054 = vmatpush1.msra.mxu0 0.0
  %1055 = vmatprep.subr.mxu0 0.0
  %1056 = vmatpush1.msra.mxu0 0.0
  %1057 = vmatprep.subr.mxu0 0.0
  %1058 = vmatpush1.msra.mxu0 0.0
  %1059 = vmatprep.subr.mxu0 0.0
  %1060 = vmatpush1.msra.mxu0 0.0
  %1061 = vmatprep.subr.mxu0 0.0
  %1062 = vmatpush1.msra.mxu0 0.0
  %1063 = vmatprep.subr.mxu0 0.0
  %1064 = vmatpush1.msra.mxu0 0.0
  %1065 = vmatprep.subr.mxu0 0.0
  %1066 = vmatpush1.msra.mxu0 0.0
  %1067 = vmatprep.subr.mxu0 0.0
  %1068 = vmatpush1.msra.mxu0 0.0
  %1069 = vmatprep.subr.mxu0 0.0
  %1070 = vmatpush1.msra.mxu0 0.0
  %1071 = vmatprep.subr.mxu0 0.0
  %1072 = vmatpush1.msra.mxu0 0.0
  %1073 = vmatprep.subr.mxu0 0.0
  %1074 = vmatpush1.msra.mxu0 0.0
  %1075 = vmatprep.subr.mxu0 0.0
  %1076 = vmatpush1.msra.mxu0 0.0
  %1077 = vmatprep.subr.mxu0 0.0
  %1078 = vmatpush1.msra.mxu0 0.0
  %1079 = vmatprep.subr.mxu0 0.0
  %1080 = vmatpush1.msra.mxu0 0.0
  %1081 = vmatprep.subr.mxu0 0.0
  %1082 = vmatpush1.msra.mxu0 0.0
  %1083 = vmatprep.subr.mxu0 0.0
  %1084 = vmatpush1.msra.mxu0 0.0
  %1085 = vmatprep.subr.mxu0 0.0
  %1086 = vmatpush1.msra.mxu0 0.0
  %1087 = vmatprep.subr.mxu0 0.0
  %1088 = vmatpush1.msra.mxu0 0.0
  %1089 = vmatprep.mubr.f32.mxu0 0.0
  %1090 = vmatmul.mubr.f32.gmra.mrb[0].mxu0 %v1023
  %v1091 = vpop.f32.mrb[0].mxu0
  %v1092 = vadd.f32 0.0, %v1091
  %v1093 = vpop.f32.mrb[0].mxu0
  %1094 = vdwg.mxu0
  %v1095 = vadd.f32 %v131, %v1092
  %v1096 = vxor.u32 %v1095, 2147483648
  %v1097 = vmul.f32 %v1096, 1.442695
  %v1098 = vpow.pop %v1097
  %v1099 = vadd.f32 %v1098, 1.0
  %v1100 = vrcp.pop %v1099
  %v1101 = vmul.f32 1.0, %v1100
  %v1102 = vtanh.pop %v1095
  %v1104 = vrot.slane %v898, 6
  %v1106 = vmul.f32 %v1101, %v1104
  %1108 = vrot.lane.b32.xlu0 %v1102, 32
  %v1109 = vpop.permute.xlu0 %1108
  %v1111 = vmul.f32 %v1101, %v1109
  %1113 = vrot.lane.b32.xlu0 %v1111, 32
  %v1114 = vpop.permute.xlu0 %1113
  %v1116 = vadd.f32 %v1106, %v1114
  %v1117 = vtanh.pop %v1116
  %1119 = vrot.lane.b32.xlu0 %v1117, 32
  %v1120 = vpop.permute.xlu0 %1119
  %v1122 = vmul.f32 %v1101, %v1120
  %v1123 = vsel %vm51, %v1016, 0
  %1125 = vmatprep.subr.mxu0 0.0
  %1126 = vmatpush1.msra.mxu0 %v139
  %1127 = vmatprep.subr.mxu0 0.0
  %1128 = vmatpush1.msra.mxu0 %v140
  %1129 = vmatprep.subr.mxu0 0.0
  %1130 = vmatpush1.msra.mxu0 %v141
  %1131 = vmatprep.subr.mxu0 0.0
  %1132 = vmatpush1.msra.mxu0 %v142
  %1133 = vmatprep.subr.mxu0 0.0
  %1134 = vmatpush1.msra.mxu0 0.0
  %1135 = vmatprep.subr.mxu0 0.0
  %1136 = vmatpush1.msra.mxu0 0.0
  %1137 = vmatprep.subr.mxu0 0.0
  %1138 = vmatpush1.msra.mxu0 0.0
  %1139 = vmatprep.subr.mxu0 0.0
  %1140 = vmatpush1.msra.mxu0 0.0
  %1141 = vmatprep.subr.mxu0 0.0
  %1142 = vmatpush1.msra.mxu0 0.0
  %1143 = vmatprep.subr.mxu0 0.0
  %1144 = vmatpush1.msra.mxu0 0.0
  %1145 = vmatprep.subr.mxu0 0.0
  %1146 = vmatpush1.msra.mxu0 0.0
  %1147 = vmatprep.subr.mxu0 0.0
  %1148 = vmatpush1.msra.mxu0 0.0
  %1149 = vmatprep.subr.mxu0 0.0
  %1150 = vmatpush1.msra.mxu0 0.0
  %1151 = vmatprep.subr.mxu0 0.0
  %1152 = vmatpush1.msra.mxu0 0.0
  %1153 = vmatprep.subr.mxu0 0.0
  %1154 = vmatpush1.msra.mxu0 0.0
  %1155 = vmatprep.subr.mxu0 0.0
  %1156 = vmatpush1.msra.mxu0 0.0
  %1157 = vmatprep.subr.mxu0 0.0
  %1158 = vmatpush1.msra.mxu0 0.0
  %1159 = vmatprep.subr.mxu0 0.0
  %1160 = vmatpush1.msra.mxu0 0.0
  %1161 = vmatprep.subr.mxu0 0.0
  %1162 = vmatpush1.msra.mxu0 0.0
  %1163 = vmatprep.subr.mxu0 0.0
  %1164 = vmatpush1.msra.mxu0 0.0
  %1165 = vmatprep.subr.mxu0 0.0
  %1166 = vmatpush1.msra.mxu0 0.0
  %1167 = vmatprep.subr.mxu0 0.0
  %1168 = vmatpush1.msra.mxu0 0.0
  %1169 = vmatprep.subr.mxu0 0.0
  %1170 = vmatpush1.msra.mxu0 0.0
  %1171 = vmatprep.subr.mxu0 0.0
  %1172 = vmatpush1.msra.mxu0 0.0
  %1173 = vmatprep.subr.mxu0 0.0
  %1174 = vmatpush1.msra.mxu0 0.0
  %1175 = vmatprep.subr.mxu0 0.0
  %1176 = vmatpush1.msra.mxu0 0.0
  %1177 = vmatprep.subr.mxu0 0.0
  %1178 = vmatpush1.msra.mxu0 0.0
  %1179 = vmatprep.subr.mxu0 0.0
  %1180 = vmatpush1.msra.mxu0 0.0
  %1181 = vmatprep.subr.mxu0 0.0
  %1182 = vmatpush1.msra.mxu0 0.0
  %1183 = vmatprep.subr.mxu0 0.0
  %1184 = vmatpush1.msra.mxu0 0.0
  %1185 = vmatprep.subr.mxu0 0.0
  %1186 = vmatpush1.msra.mxu0 0.0
  %1187 = vmatprep.subr.mxu0 0.0
  %1188 = vmatpush1.msra.mxu0 0.0
  %1189 = vmatprep.mubr.f32.mxu0 0.0
  %1190 = vmatmul.mubr.f32.gmra.mrb[0].mxu0 %v1123
  %v1191 = vpop.f32.mrb[0].mxu0
  %v1192 = vadd.f32 0.0, %v1191
  %v1193 = vpop.f32.mrb[0].mxu0
  %1194 = vdwg.mxu0
  %v1196 = vrot.slane %v1192, 2
  %v1198 = vadd.f32 %v127, %v1196
  %v1199 = vxor.u32 %v1198, 2147483648
  %v1200 = vmul.f32 %v1199, 1.442695
  %v1201 = vpow.pop %v1200
  %v1202 = vadd.f32 %v1201, 1.0
  %v1203 = vrcp.pop %v1202
  %v1204 = vmul.f32 1.0, %v1203
  %v1205 = vtanh.pop %v1198
  %v1207 = vrot.slane %v1001, 2
  %v1209 = vmul.f32 %v1204, %v1207
  %1211 = vrot.lane.b32.xlu0 %v1205, 32
  %v1212 = vpop.permute.xlu0 %1211
  %v1214 = vmul.f32 %v1204, %v1212
  %1216 = vrot.lane.b32.xlu0 %v1214, 32
  %v1217 = vpop.permute.xlu0 %1216
  %v1219 = vadd.f32 %v1209, %v1217
  %v1220 = vtanh.pop %v1219
  %1222 = vrot.lane.b32.xlu0 %v1220, 32
  %v1223 = vpop.permute.xlu0 %1222
  %v1225 = vmul.f32 %v1204, %v1223
  %1227 = vrot.lane.b32.xlu0 %v1122, 64
  %v1228 = vpop.permute.xlu0 %1227
  %s1230 = scalar_lea.vmem [#allocation2], 8
  %1231 = vst.msk [vmem:[%s1230] sm:$0x3] %vm343, %v1228
  %1233 = vrot.lane.b32.xlu0 %v1225, 64
  %v1234 = vpop.permute.xlu0 %1233
  %s1236 = scalar_lea.vmem [#allocation3], 6
  %1237 = vst.msk [vmem:[%s1236 - $0x6] sm:$0xc0] %vm350, %v1234
  %v1238 = vsel %vm51, %v1228, 0
  %1240 = vmatprep.subr.mxu0 0.0
  %1241 = vmatpush1.msra.mxu0 %v135
  %1242 = vmatprep.subr.mxu0 0.0
  %1243 = vmatpush1.msra.mxu0 %v136
  %1244 = vmatprep.subr.mxu0 0.0
  %1245 = vmatpush1.msra.mxu0 %v137
  %1246 = vmatprep.subr.mxu0 0.0
  %1247 = vmatpush1.msra.mxu0 %v138
  %1248 = vmatprep.subr.mxu0 0.0
  %1249 = vmatpush1.msra.mxu0 0.0
  %1250 = vmatprep.subr.mxu0 0.0
  %1251 = vmatpush1.msra.mxu0 0.0
  %1252 = vmatprep.subr.mxu0 0.0
  %1253 = vmatpush1.msra.mxu0 0.0
  %1254 = vmatprep.subr.mxu0 0.0
  %1255 = vmatpush1.msra.mxu0 0.0
  %1256 = vmatprep.subr.mxu0 0.0
  %1257 = vmatpush1.msra.mxu0 0.0
  %1258 = vmatprep.subr.mxu0 0.0
  %1259 = vmatpush1.msra.mxu0 0.0
  %1260 = vmatprep.subr.mxu0 0.0
  %1261 = vmatpush1.msra.mxu0 0.0
  %1262 = vmatprep.subr.mxu0 0.0
  %1263 = vmatpush1.msra.mxu0 0.0
  %1264 = vmatprep.subr.mxu0 0.0
  %1265 = vmatpush1.msra.mxu0 0.0
  %1266 = vmatprep.subr.mxu0 0.0
  %1267 = vmatpush1.msra.mxu0 0.0
  %1268 = vmatprep.subr.mxu0 0.0
  %1269 = vmatpush1.msra.mxu0 0.0
  %1270 = vmatprep.subr.mxu0 0.0
  %1271 = vmatpush1.msra.mxu0 0.0
  %1272 = vmatprep.subr.mxu0 0.0
  %1273 = vmatpush1.msra.mxu0 0.0
  %1274 = vmatprep.subr.mxu0 0.0
  %1275 = vmatpush1.msra.mxu0 0.0
  %1276 = vmatprep.subr.mxu0 0.0
  %1277 = vmatpush1.msra.mxu0 0.0
  %1278 = vmatprep.subr.mxu0 0.0
  %1279 = vmatpush1.msra.mxu0 0.0
  %1280 = vmatprep.subr.mxu0 0.0
  %1281 = vmatpush1.msra.mxu0 0.0
  %1282 = vmatprep.subr.mxu0 0.0
  %1283 = vmatpush1.msra.mxu0 0.0
  %1284 = vmatprep.subr.mxu0 0.0
  %1285 = vmatpush1.msra.mxu0 0.0
  %1286 = vmatprep.subr.mxu0 0.0
  %1287 = vmatpush1.msra.mxu0 0.0
  %1288 = vmatprep.subr.mxu0 0.0
  %1289 = vmatpush1.msra.mxu0 0.0
  %1290 = vmatprep.subr.mxu0 0.0
  %1291 = vmatpush1.msra.mxu0 0.0
  %1292 = vmatprep.subr.mxu0 0.0
  %1293 = vmatpush1.msra.mxu0 0.0
  %1294 = vmatprep.subr.mxu0 0.0
  %1295 = vmatpush1.msra.mxu0 0.0
  %1296 = vmatprep.subr.mxu0 0.0
  %1297 = vmatpush1.msra.mxu0 0.0
  %1298 = vmatprep.subr.mxu0 0.0
  %1299 = vmatpush1.msra.mxu0 0.0
  %1300 = vmatprep.subr.mxu0 0.0
  %1301 = vmatpush1.msra.mxu0 0.0
  %1302 = vmatprep.subr.mxu0 0.0
  %1303 = vmatpush1.msra.mxu0 0.0
  %1304 = vmatprep.mubr.f32.mxu0 0.0
  %1305 = vmatmul.mubr.f32.gmra.mrb[0].mxu0 %v1238
  %v1306 = vpop.f32.mrb[0].mxu0
  %v1307 = vadd.f32 0.0, %v1306
  %v1308 = vpop.f32.mrb[0].mxu0
  %1309 = vdwg.mxu0
  %v1311 = vrot.slane %v1307, 6
  %v1313 = vadd.f32 %v131, %v1311
  %v1314 = vxor.u32 %v1313, 2147483648
  %v1315 = vmul.f32 %v1314, 1.442695
  %v1316 = vpow.pop %v1315
  %v1317 = vadd.f32 %v1316, 1.0
  %v1318 = vrcp.pop %v1317
  %v1319 = vmul.f32 1.0, %v1318
  %v1320 = vtanh.pop %v1313
  %v1322 = vrot.slane %v1116, 6
  %v1324 = vmul.f32 %v1319, %v1322
  %1326 = vrot.lane.b32.xlu0 %v1320, 32
  %v1327 = vpop.permute.xlu0 %1326
  %v1329 = vmul.f32 %v1319, %v1327
  %1331 = vrot.lane.b32.xlu0 %v1329, 32
  %v1332 = vpop.permute.xlu0 %1331
  %v1334 = vadd.f32 %v1324, %v1332
  %v1335 = vtanh.pop %v1334
  %1337 = vrot.lane.b32.xlu0 %v1335, 32
  %v1338 = vpop.permute.xlu0 %1337
  %v1340 = vmul.f32 %v1319, %v1338
  %v1341 = vrot.slane %v1225, 6
  %1342 = vrot.lane.b32.xlu0 %v1341, 64
  %v1343 = vpop.permute.xlu0 %1342
  %v1344 = vsel %vm51, %v1343, 0
  %1346 = vmatprep.subr.mxu0 0.0
  %1347 = vmatpush1.msra.mxu0 %v139
  %1348 = vmatprep.subr.mxu0 0.0
  %1349 = vmatpush1.msra.mxu0 %v140
  %1350 = vmatprep.subr.mxu0 0.0
  %1351 = vmatpush1.msra.mxu0 %v141
  %1352 = vmatprep.subr.mxu0 0.0
  %1353 = vmatpush1.msra.mxu0 %v142
  %1354 = vmatprep.subr.mxu0 0.0
  %1355 = vmatpush1.msra.mxu0 0.0
  %1356 = vmatprep.subr.mxu0 0.0
  %1357 = vmatpush1.msra.mxu0 0.0
  %1358 = vmatprep.subr.mxu0 0.0
  %1359 = vmatpush1.msra.mxu0 0.0
  %1360 = vmatprep.subr.mxu0 0.0
  %1361 = vmatpush1.msra.mxu0 0.0
  %1362 = vmatprep.subr.mxu0 0.0
  %1363 = vmatpush1.msra.mxu0 0.0
  %1364 = vmatprep.subr.mxu0 0.0
  %1365 = vmatpush1.msra.mxu0 0.0
  %1366 = vmatprep.subr.mxu0 0.0
  %1367 = vmatpush1.msra.mxu0 0.0
  %1368 = vmatprep.subr.mxu0 0.0
  %1369 = vmatpush1.msra.mxu0 0.0
  %1370 = vmatprep.subr.mxu0 0.0
  %1371 = vmatpush1.msra.mxu0 0.0
  %1372 = vmatprep.subr.mxu0 0.0
  %1373 = vmatpush1.msra.mxu0 0.0
  %1374 = vmatprep.subr.mxu0 0.0
  %1375 = vmatpush1.msra.mxu0 0.0
  %1376 = vmatprep.subr.mxu0 0.0
  %1377 = vmatpush1.msra.mxu0 0.0
  %1378 = vmatprep.subr.mxu0 0.0
  %1379 = vmatpush1.msra.mxu0 0.0
  %1380 = vmatprep.subr.mxu0 0.0
  %1381 = vmatpush1.msra.mxu0 0.0
  %1382 = vmatprep.subr.mxu0 0.0
  %1383 = vmatpush1.msra.mxu0 0.0
  %1384 = vmatprep.subr.mxu0 0.0
  %1385 = vmatpush1.msra.mxu0 0.0
  %1386 = vmatprep.subr.mxu0 0.0
  %1387 = vmatpush1.msra.mxu0 0.0
  %1388 = vmatprep.subr.mxu0 0.0
  %1389 = vmatpush1.msra.mxu0 0.0
  %1390 = vmatprep.subr.mxu0 0.0
  %1391 = vmatpush1.msra.mxu0 0.0
  %1392 = vmatprep.subr.mxu0 0.0
  %1393 = vmatpush1.msra.mxu0 0.0
  %1394 = vmatprep.subr.mxu0 0.0
  %1395 = vmatpush1.msra.mxu0 0.0
  %1396 = vmatprep.subr.mxu0 0.0
  %1397 = vmatpush1.msra.mxu0 0.0
  %1398 = vmatprep.subr.mxu0 0.0
  %1399 = vmatpush1.msra.mxu0 0.0
  %1400 = vmatprep.subr.mxu0 0.0
  %1401 = vmatpush1.msra.mxu0 0.0
  %1402 = vmatprep.subr.mxu0 0.0
  %1403 = vmatpush1.msra.mxu0 0.0
  %1404 = vmatprep.subr.mxu0 0.0
  %1405 = vmatpush1.msra.mxu0 0.0
  %1406 = vmatprep.subr.mxu0 0.0
  %1407 = vmatpush1.msra.mxu0 0.0
  %1408 = vmatprep.subr.mxu0 0.0
  %1409 = vmatpush1.msra.mxu0 0.0
  %1410 = vmatprep.mubr.f32.mxu0 0.0
  %1411 = vmatmul.mubr.f32.gmra.mrb[0].mxu0 %v1344
  %v1412 = vpop.f32.mrb[0].mxu0
  %v1413 = vadd.f32 0.0, %v1412
  %v1414 = vpop.f32.mrb[0].mxu0
  %1415 = vdwg.mxu0
  %v1417 = vrot.slane %v1413, 4
  %v1419 = vadd.f32 %v127, %v1417
  %v1420 = vxor.u32 %v1419, 2147483648
  %v1421 = vmul.f32 %v1420, 1.442695
  %v1422 = vpow.pop %v1421
  %v1423 = vadd.f32 %v1422, 1.0
  %v1424 = vrcp.pop %v1423
  %v1425 = vmul.f32 1.0, %v1424
  %v1426 = vtanh.pop %v1419
  %v1428 = vrot.slane %v1219, 2
  %v1430 = vmul.f32 %v1425, %v1428
  %1432 = vrot.lane.b32.xlu0 %v1426, 32
  %v1433 = vpop.permute.xlu0 %1432
  %v1435 = vmul.f32 %v1425, %v1433
  %1437 = vrot.lane.b32.xlu0 %v1435, 32
  %v1438 = vpop.permute.xlu0 %1437
  %v1440 = vadd.f32 %v1430, %v1438
  %v1441 = vtanh.pop %v1440
  %1443 = vrot.lane.b32.xlu0 %v1441, 32
  %v1444 = vpop.permute.xlu0 %1443
  %v1446 = vmul.f32 %v1425, %v1444
  %1448 = vrot.lane.b32.xlu0 %v1340, 64
  %v1449 = vpop.permute.xlu0 %1448
  %s1451 = scalar_lea.vmem [#allocation2], 10
  %1452 = vst.msk [vmem:[%s1451 - $0x2] sm:$0xc] %vm566, %v1449
  %1454 = vrot.lane.b32.xlu0 %v1446, 64
  %v1455 = vpop.permute.xlu0 %1454
  %s1457 = scalar_lea.vmem [#allocation3], 4
  %1458 = vst.msk [vmem:[%s1457 - $0x4] sm:$0x30] %vm573, %v1455
  %v1459 = vrot.slane %v1340, 2
  %1460 = vrot.lane.b32.xlu0 %v1459, 64
  %v1461 = vpop.permute.xlu0 %1460
  %v1462 = vsel %vm51, %v1461, 0
  %1464 = vmatprep.subr.mxu0 0.0
  %1465 = vmatpush1.msra.mxu0 %v135
  %1466 = vmatprep.subr.mxu0 0.0
  %1467 = vmatpush1.msra.mxu0 %v136
  %1468 = vmatprep.subr.mxu0 0.0
  %1469 = vmatpush1.msra.mxu0 %v137
  %1470 = vmatprep.subr.mxu0 0.0
  %1471 = vmatpush1.msra.mxu0 %v138
  %1472 = vmatprep.subr.mxu0 0.0
  %1473 = vmatpush1.msra.mxu0 0.0
  %1474 = vmatprep.subr.mxu0 0.0
  %1475 = vmatpush1.msra.mxu0 0.0
  %1476 = vmatprep.subr.mxu0 0.0
  %1477 = vmatpush1.msra.mxu0 0.0
  %1478 = vmatprep.subr.mxu0 0.0
  %1479 = vmatpush1.msra.mxu0 0.0
  %1480 = vmatprep.subr.mxu0 0.0
  %1481 = vmatpush1.msra.mxu0 0.0
  %1482 = vmatprep.subr.mxu0 0.0
  %1483 = vmatpush1.msra.mxu0 0.0
  %1484 = vmatprep.subr.mxu0 0.0
  %1485 = vmatpush1.msra.mxu0 0.0
  %1486 = vmatprep.subr.mxu0 0.0
  %1487 = vmatpush1.msra.mxu0 0.0
  %1488 = vmatprep.subr.mxu0 0.0
  %1489 = vmatpush1.msra.mxu0 0.0
  %1490 = vmatprep.subr.mxu0 0.0
  %1491 = vmatpush1.msra.mxu0 0.0
  %1492 = vmatprep.subr.mxu0 0.0
  %1493 = vmatpush1.msra.mxu0 0.0
  %1494 = vmatprep.subr.mxu0 0.0
  %1495 = vmatpush1.msra.mxu0 0.0
  %1496 = vmatprep.subr.mxu0 0.0
  %1497 = vmatpush1.msra.mxu0 0.0
  %1498 = vmatprep.subr.mxu0 0.0
  %1499 = vmatpush1.msra.mxu0 0.0
  %1500 = vmatprep.subr.mxu0 0.0
  %1501 = vmatpush1.msra.mxu0 0.0
  %1502 = vmatprep.subr.mxu0 0.0
  %1503 = vmatpush1.msra.mxu0 0.0
  %1504 = vmatprep.subr.mxu0 0.0
  %1505 = vmatpush1.msra.mxu0 0.0
  %1506 = vmatprep.subr.mxu0 0.0
  %1507 = vmatpush1.msra.mxu0 0.0
  %1508 = vmatprep.subr.mxu0 0.0
  %1509 = vmatpush1.msra.mxu0 0.0
  %1510 = vmatprep.subr.mxu0 0.0
  %1511 = vmatpush1.msra.mxu0 0.0
  %1512 = vmatprep.subr.mxu0 0.0
  %1513 = vmatpush1.msra.mxu0 0.0
  %1514 = vmatprep.subr.mxu0 0.0
  %1515 = vmatpush1.msra.mxu0 0.0
  %1516 = vmatprep.subr.mxu0 0.0
  %1517 = vmatpush1.msra.mxu0 0.0
  %1518 = vmatprep.subr.mxu0 0.0
  %1519 = vmatpush1.msra.mxu0 0.0
  %1520 = vmatprep.subr.mxu0 0.0
  %1521 = vmatpush1.msra.mxu0 0.0
  %1522 = vmatprep.subr.mxu0 0.0
  %1523 = vmatpush1.msra.mxu0 0.0
  %1524 = vmatprep.subr.mxu0 0.0
  %1525 = vmatpush1.msra.mxu0 0.0
  %1526 = vmatprep.subr.mxu0 0.0
  %1527 = vmatpush1.msra.mxu0 0.0
  %1528 = vmatprep.mubr.f32.mxu0 0.0
  %1529 = vmatmul.mubr.f32.gmra.mrb[0].mxu0 %v1462
  %v1530 = vpop.f32.mrb[0].mxu0
  %v1531 = vadd.f32 0.0, %v1530
  %v1532 = vpop.f32.mrb[0].mxu0
  %1533 = vdwg.mxu0
  %v1535 = vrot.slane %v1531, 4
  %v1537 = vadd.f32 %v131, %v1535
  %v1538 = vxor.u32 %v1537, 2147483648
  %v1539 = vmul.f32 %v1538, 1.442695
  %v1540 = vpow.pop %v1539
  %v1541 = vadd.f32 %v1540, 1.0
  %v1542 = vrcp.pop %v1541
  %v1543 = vmul.f32 1.0, %v1542
  %v1544 = vtanh.pop %v1537
  %v1546 = vrot.slane %v1334, 6
  %v1548 = vmul.f32 %v1543, %v1546
  %1550 = vrot.lane.b32.xlu0 %v1544, 32
  %v1551 = vpop.permute.xlu0 %1550
  %v1553 = vmul.f32 %v1543, %v1551
  %1555 = vrot.lane.b32.xlu0 %v1553, 32
  %v1556 = vpop.permute.xlu0 %1555
  %v1558 = vadd.f32 %v1548, %v1556
  %v1559 = vtanh.pop %v1558
  %1561 = vrot.lane.b32.xlu0 %v1559, 32
  %v1562 = vpop.permute.xlu0 %1561
  %v1564 = vmul.f32 %v1543, %v1562
  %v1565 = vrot.slane %v1446, 4
  %1566 = vrot.lane.b32.xlu0 %v1565, 64
  %v1567 = vpop.permute.xlu0 %1566
  %v1568 = vsel %vm51, %v1567, 0
  %1570 = vmatprep.subr.mxu0 0.0
  %1571 = vmatpush1.msra.mxu0 %v139
  %1572 = vmatprep.subr.mxu0 0.0
  %1573 = vmatpush1.msra.mxu0 %v140
  %1574 = vmatprep.subr.mxu0 0.0
  %1575 = vmatpush1.msra.mxu0 %v141
  %1576 = vmatprep.subr.mxu0 0.0
  %1577 = vmatpush1.msra.mxu0 %v142
  %1578 = vmatprep.subr.mxu0 0.0
  %1579 = vmatpush1.msra.mxu0 0.0
  %1580 = vmatprep.subr.mxu0 0.0
  %1581 = vmatpush1.msra.mxu0 0.0
  %1582 = vmatprep.subr.mxu0 0.0
  %1583 = vmatpush1.msra.mxu0 0.0
  %1584 = vmatprep.subr.mxu0 0.0
  %1585 = vmatpush1.msra.mxu0 0.0
  %1586 = vmatprep.subr.mxu0 0.0
  %1587 = vmatpush1.msra.mxu0 0.0
  %1588 = vmatprep.subr.mxu0 0.0
  %1589 = vmatpush1.msra.mxu0 0.0
  %1590 = vmatprep.subr.mxu0 0.0
  %1591 = vmatpush1.msra.mxu0 0.0
  %1592 = vmatprep.subr.mxu0 0.0
  %1593 = vmatpush1.msra.mxu0 0.0
  %1594 = vmatprep.subr.mxu0 0.0
  %1595 = vmatpush1.msra.mxu0 0.0
  %1596 = vmatprep.subr.mxu0 0.0
  %1597 = vmatpush1.msra.mxu0 0.0
  %1598 = vmatprep.subr.mxu0 0.0
  %1599 = vmatpush1.msra.mxu0 0.0
  %1600 = vmatprep.subr.mxu0 0.0
  %1601 = vmatpush1.msra.mxu0 0.0
  %1602 = vmatprep.subr.mxu0 0.0
  %1603 = vmatpush1.msra.mxu0 0.0
  %1604 = vmatprep.subr.mxu0 0.0
  %1605 = vmatpush1.msra.mxu0 0.0
  %1606 = vmatprep.subr.mxu0 0.0
  %1607 = vmatpush1.msra.mxu0 0.0
  %1608 = vmatprep.subr.mxu0 0.0
  %1609 = vmatpush1.msra.mxu0 0.0
  %1610 = vmatprep.subr.mxu0 0.0
  %1611 = vmatpush1.msra.mxu0 0.0
  %1612 = vmatprep.subr.mxu0 0.0
  %1613 = vmatpush1.msra.mxu0 0.0
  %1614 = vmatprep.subr.mxu0 0.0
  %1615 = vmatpush1.msra.mxu0 0.0
  %1616 = vmatprep.subr.mxu0 0.0
  %1617 = vmatpush1.msra.mxu0 0.0
  %1618 = vmatprep.subr.mxu0 0.0
  %1619 = vmatpush1.msra.mxu0 0.0
  %1620 = vmatprep.subr.mxu0 0.0
  %1621 = vmatpush1.msra.mxu0 0.0
  %1622 = vmatprep.subr.mxu0 0.0
  %1623 = vmatpush1.msra.mxu0 0.0
  %1624 = vmatprep.subr.mxu0 0.0
  %1625 = vmatpush1.msra.mxu0 0.0
  %1626 = vmatprep.subr.mxu0 0.0
  %1627 = vmatpush1.msra.mxu0 0.0
  %1628 = vmatprep.subr.mxu0 0.0
  %1629 = vmatpush1.msra.mxu0 0.0
  %1630 = vmatprep.subr.mxu0 0.0
  %1631 = vmatpush1.msra.mxu0 0.0
  %1632 = vmatprep.subr.mxu0 0.0
  %1633 = vmatpush1.msra.mxu0 0.0
  %1634 = vmatprep.mubr.f32.mxu0 0.0
  %1635 = vmatmul.mubr.f32.gmra.mrb[0].mxu0 %v1568
  %v1636 = vpop.f32.mrb[0].mxu0
  %v1637 = vadd.f32 0.0, %v1636
  %v1638 = vpop.f32.mrb[0].mxu0
  %1639 = vdwg.mxu0
  %v1641 = vrot.slane %v1637, 6
  %v1643 = vadd.f32 %v127, %v1641
  %v1644 = vxor.u32 %v1643, 2147483648
  %v1645 = vmul.f32 %v1644, 1.442695
  %v1646 = vpow.pop %v1645
  %v1647 = vadd.f32 %v1646, 1.0
  %v1648 = vrcp.pop %v1647
  %v1649 = vmul.f32 1.0, %v1648
  %v1650 = vtanh.pop %v1643
  %v1652 = vrot.slane %v1440, 2
  %v1654 = vmul.f32 %v1649, %v1652
  %1656 = vrot.lane.b32.xlu0 %v1650, 32
  %v1657 = vpop.permute.xlu0 %1656
  %v1659 = vmul.f32 %v1649, %v1657
  %1661 = vrot.lane.b32.xlu0 %v1659, 32
  %v1662 = vpop.permute.xlu0 %1661
  %v1664 = vadd.f32 %v1654, %v1662
  %v1665 = vtanh.pop %v1664
  %1667 = vrot.lane.b32.xlu0 %v1665, 32
  %v1668 = vpop.permute.xlu0 %1667
  %v1670 = vmul.f32 %v1649, %v1668
  %1672 = vrot.lane.b32.xlu0 %v1564, 64
  %v1673 = vpop.permute.xlu0 %1672
  %s1675 = scalar_lea.vmem [#allocation2], 12
  %1676 = vst.msk [vmem:[%s1675 - $0x4] sm:$0x30] %vm573, %v1673
  %1678 = vrot.lane.b32.xlu0 %v1670, 64
  %v1679 = vpop.permute.xlu0 %1678
  %s1681 = scalar_lea.vmem [#allocation3], 2
  %1682 = vst.msk [vmem:[%s1681 - $0x2] sm:$0xc] %vm566, %v1679
  %v1683 = vrot.slane %v1564, 4
  %1684 = vrot.lane.b32.xlu0 %v1683, 64
  %v1685 = vpop.permute.xlu0 %1684
  %v1686 = vsel %vm51, %v1685, 0
  %1688 = vmatprep.subr.mxu0 0.0
  %1689 = vmatpush1.msra.mxu0 %v135
  %1690 = vmatprep.subr.mxu0 0.0
  %1691 = vmatpush1.msra.mxu0 %v136
  %1692 = vmatprep.subr.mxu0 0.0
  %1693 = vmatpush1.msra.mxu0 %v137
  %1694 = vmatprep.subr.mxu0 0.0
  %1695 = vmatpush1.msra.mxu0 %v138
  %1696 = vmatprep.subr.mxu0 0.0
  %1697 = vmatpush1.msra.mxu0 0.0
  %1698 = vmatprep.subr.mxu0 0.0
  %1699 = vmatpush1.msra.mxu0 0.0
  %1700 = vmatprep.subr.mxu0 0.0
  %1701 = vmatpush1.msra.mxu0 0.0
  %1702 = vmatprep.subr.mxu0 0.0
  %1703 = vmatpush1.msra.mxu0 0.0
  %1704 = vmatprep.subr.mxu0 0.0
  %1705 = vmatpush1.msra.mxu0 0.0
  %1706 = vmatprep.subr.mxu0 0.0
  %1707 = vmatpush1.msra.mxu0 0.0
  %1708 = vmatprep.subr.mxu0 0.0
  %1709 = vmatpush1.msra.mxu0 0.0
  %1710 = vmatprep.subr.mxu0 0.0
  %1711 = vmatpush1.msra.mxu0 0.0
  %1712 = vmatprep.subr.mxu0 0.0
  %1713 = vmatpush1.msra.mxu0 0.0
  %1714 = vmatprep.subr.mxu0 0.0
  %1715 = vmatpush1.msra.mxu0 0.0
  %1716 = vmatprep.subr.mxu0 0.0
  %1717 = vmatpush1.msra.mxu0 0.0
  %1718 = vmatprep.subr.mxu0 0.0
  %1719 = vmatpush1.msra.mxu0 0.0
  %1720 = vmatprep.subr.mxu0 0.0
  %1721 = vmatpush1.msra.mxu0 0.0
  %1722 = vmatprep.subr.mxu0 0.0
  %1723 = vmatpush1.msra.mxu0 0.0
  %1724 = vmatprep.subr.mxu0 0.0
  %1725 = vmatpush1.msra.mxu0 0.0
  %1726 = vmatprep.subr.mxu0 0.0
  %1727 = vmatpush1.msra.mxu0 0.0
  %1728 = vmatprep.subr.mxu0 0.0
  %1729 = vmatpush1.msra.mxu0 0.0
  %1730 = vmatprep.subr.mxu0 0.0
  %1731 = vmatpush1.msra.mxu0 0.0
  %1732 = vmatprep.subr.mxu0 0.0
  %1733 = vmatpush1.msra.mxu0 0.0
  %1734 = vmatprep.subr.mxu0 0.0
  %1735 = vmatpush1.msra.mxu0 0.0
  %1736 = vmatprep.subr.mxu0 0.0
  %1737 = vmatpush1.msra.mxu0 0.0
  %1738 = vmatprep.subr.mxu0 0.0
  %1739 = vmatpush1.msra.mxu0 0.0
  %1740 = vmatprep.subr.mxu0 0.0
  %1741 = vmatpush1.msra.mxu0 0.0
  %1742 = vmatprep.subr.mxu0 0.0
  %1743 = vmatpush1.msra.mxu0 0.0
  %1744 = vmatprep.subr.mxu0 0.0
  %1745 = vmatpush1.msra.mxu0 0.0
  %1746 = vmatprep.subr.mxu0 0.0
  %1747 = vmatpush1.msra.mxu0 0.0
  %1748 = vmatprep.subr.mxu0 0.0
  %1749 = vmatpush1.msra.mxu0 0.0
  %1750 = vmatprep.subr.mxu0 0.0
  %1751 = vmatpush1.msra.mxu0 0.0
  %1752 = vmatprep.mubr.f32.mxu0 0.0
  %1753 = vmatmul.mubr.f32.gmra.mrb[0].mxu0 %v1686
  %v1754 = vpop.f32.mrb[0].mxu0
  %v1755 = vadd.f32 0.0, %v1754
  %v1756 = vpop.f32.mrb[0].mxu0
  %1757 = vdwg.mxu0
  %v1759 = vrot.slane %v1755, 2
  %v1761 = vadd.f32 %v131, %v1759
  %v1762 = vxor.u32 %v1761, 2147483648
  %v1763 = vmul.f32 %v1762, 1.442695
  %v1764 = vpow.pop %v1763
  %v1765 = vadd.f32 %v1764, 1.0
  %v1766 = vrcp.pop %v1765
  %v1767 = vmul.f32 1.0, %v1766
  %v1768 = vtanh.pop %v1761
  %v1770 = vrot.slane %v1558, 6
  %v1772 = vmul.f32 %v1767, %v1770
  %1774 = vrot.lane.b32.xlu0 %v1768, 32
  %v1775 = vpop.permute.xlu0 %1774
  %v1777 = vmul.f32 %v1767, %v1775
  %1779 = vrot.lane.b32.xlu0 %v1777, 32
  %v1780 = vpop.permute.xlu0 %1779
  %v1782 = vadd.f32 %v1772, %v1780
  %v1783 = vtanh.pop %v1782
  %1785 = vrot.lane.b32.xlu0 %v1783, 32
  %v1786 = vpop.permute.xlu0 %1785
  %v1788 = vmul.f32 %v1767, %v1786
  %v1789 = vrot.slane %v1670, 2
  %1790 = vrot.lane.b32.xlu0 %v1789, 64
  %v1791 = vpop.permute.xlu0 %1790
  %v1792 = vsel %vm51, %v1791, 0
  %1794 = vmatprep.subr.mxu0 0.0
  %1795 = vmatpush1.msra.mxu0 %v139
  %1796 = vmatprep.subr.mxu0 0.0
  %1797 = vmatpush1.msra.mxu0 %v140
  %1798 = vmatprep.subr.mxu0 0.0
  %1799 = vmatpush1.msra.mxu0 %v141
  %1800 = vmatprep.subr.mxu0 0.0
  %1801 = vmatpush1.msra.mxu0 %v142
  %1802 = vmatprep.subr.mxu0 0.0
  %1803 = vmatpush1.msra.mxu0 0.0
  %1804 = vmatprep.subr.mxu0 0.0
  %1805 = vmatpush1.msra.mxu0 0.0
  %1806 = vmatprep.subr.mxu0 0.0
  %1807 = vmatpush1.msra.mxu0 0.0
  %1808 = vmatprep.subr.mxu0 0.0
  %1809 = vmatpush1.msra.mxu0 0.0
  %1810 = vmatprep.subr.mxu0 0.0
  %1811 = vmatpush1.msra.mxu0 0.0
  %1812 = vmatprep.subr.mxu0 0.0
  %1813 = vmatpush1.msra.mxu0 0.0
  %1814 = vmatprep.subr.mxu0 0.0
  %1815 = vmatpush1.msra.mxu0 0.0
  %1816 = vmatprep.subr.mxu0 0.0
  %1817 = vmatpush1.msra.mxu0 0.0
  %1818 = vmatprep.subr.mxu0 0.0
  %1819 = vmatpush1.msra.mxu0 0.0
  %1820 = vmatprep.subr.mxu0 0.0
  %1821 = vmatpush1.msra.mxu0 0.0
  %1822 = vmatprep.subr.mxu0 0.0
  %1823 = vmatpush1.msra.mxu0 0.0
  %1824 = vmatprep.subr.mxu0 0.0
  %1825 = vmatpush1.msra.mxu0 0.0
  %1826 = vmatprep.subr.mxu0 0.0
  %1827 = vmatpush1.msra.mxu0 0.0
  %1828 = vmatprep.subr.mxu0 0.0
  %1829 = vmatpush1.msra.mxu0 0.0
  %1830 = vmatprep.subr.mxu0 0.0
  %1831 = vmatpush1.msra.mxu0 0.0
  %1832 = vmatprep.subr.mxu0 0.0
  %1833 = vmatpush1.msra.mxu0 0.0
  %1834 = vmatprep.subr.mxu0 0.0
  %1835 = vmatpush1.msra.mxu0 0.0
  %1836 = vmatprep.subr.mxu0 0.0
  %1837 = vmatpush1.msra.mxu0 0.0
  %1838 = vmatprep.subr.mxu0 0.0
  %1839 = vmatpush1.msra.mxu0 0.0
  %1840 = vmatprep.subr.mxu0 0.0
  %1841 = vmatpush1.msra.mxu0 0.0
  %1842 = vmatprep.subr.mxu0 0.0
  %1843 = vmatpush1.msra.mxu0 0.0
  %1844 = vmatprep.subr.mxu0 0.0
  %1845 = vmatpush1.msra.mxu0 0.0
  %1846 = vmatprep.subr.mxu0 0.0
  %1847 = vmatpush1.msra.mxu0 0.0
  %1848 = vmatprep.subr.mxu0 0.0
  %1849 = vmatpush1.msra.mxu0 0.0
  %1850 = vmatprep.subr.mxu0 0.0
  %1851 = vmatpush1.msra.mxu0 0.0
  %1852 = vmatprep.subr.mxu0 0.0
  %1853 = vmatpush1.msra.mxu0 0.0
  %1854 = vmatprep.subr.mxu0 0.0
  %1855 = vmatpush1.msra.mxu0 0.0
  %1856 = vmatprep.subr.mxu0 0.0
  %1857 = vmatpush1.msra.mxu0 0.0
  %1858 = vmatprep.mubr.f32.mxu0 0.0
  %1859 = vmatmul.mubr.f32.gmra.mrb[0].mxu0 %v1792
  %v1860 = vpop.f32.mrb[0].mxu0
  %v1861 = vadd.f32 0.0, %v1860
  %v1862 = vpop.f32.mrb[0].mxu0
  %1863 = vdwg.mxu0
  %v1864 = vadd.f32 %v127, %v1861
  %v1865 = vxor.u32 %v1864, 2147483648
  %v1866 = vmul.f32 %v1865, 1.442695
  %v1867 = vpow.pop %v1866
  %v1868 = vadd.f32 %v1867, 1.0
  %v1869 = vrcp.pop %v1868
  %v1870 = vmul.f32 1.0, %v1869
  %v1871 = vtanh.pop %v1864
  %v1873 = vrot.slane %v1664, 2
  %v1875 = vmul.f32 %v1870, %v1873
  %1877 = vrot.lane.b32.xlu0 %v1871, 32
  %v1878 = vpop.permute.xlu0 %1877
  %v1880 = vmul.f32 %v1870, %v1878
  %1882 = vrot.lane.b32.xlu0 %v1880, 32
  %v1883 = vpop.permute.xlu0 %1882
  %v1885 = vadd.f32 %v1875, %v1883
  %v1886 = vtanh.pop %v1885
  %1888 = vrot.lane.b32.xlu0 %v1886, 32
  %v1889 = vpop.permute.xlu0 %1888
  %v1891 = vmul.f32 %v1870, %v1889
  %1893 = vrot.lane.b32.xlu0 %v1788, 64
  %v1894 = vpop.permute.xlu0 %1893
  %s1896 = scalar_lea.vmem [#allocation2], 14
  %1897 = vst.msk [vmem:[%s1896 - $0x6] sm:$0xc0] %vm350, %v1894
  %1899 = vrot.lane.b32.xlu0 %v1891, 64
  %v1900 = vpop.permute.xlu0 %1899
  %1902 = vst.msk [vmem:[#allocation3] sm:$0x3] %vm343, %v1900
  %v1903 = vld [vmem:[#allocation2] sm:$0x3]
  %v1904 = vld [vmem:[#allocation2 + $0x2] sm:$0x3]
  %v1905 = vld [vmem:[#allocation2 + $0x4] sm:$0x3]
  %v1906 = vld [vmem:[#allocation2 + $0x6] sm:$0x3]
  %v1907 = vld [vmem:[#allocation2 + $0x8] sm:$0x3]
  %v1908 = vld [vmem:[#allocation2 + $0xa] sm:$0x3]
  %v1909 = vld [vmem:[#allocation2 + $0xc] sm:$0x3]
  %v1910 = vld [vmem:[#allocation2 + $0xe] sm:$0x3]
  %v1911 = vld [vmem:[#allocation3] sm:$0x3]
  %v1912 = vld [vmem:[#allocation3 + $0x2] sm:$0x3]
  %v1913 = vld [vmem:[#allocation3 + $0x4] sm:$0x3]
  %v1914 = vld [vmem:[#allocation3 + $0x6] sm:$0x3]
  %v1915 = vld [vmem:[#allocation3 + $0x8] sm:$0x3]
  %v1916 = vld [vmem:[#allocation3 + $0xa] sm:$0x3]
  %v1917 = vld [vmem:[#allocation3 + $0xc] sm:$0x3]
  %v1918 = vld [vmem:[#allocation3 + $0xe] sm:$0x3]
  %v1919 = vld [vmem:[%s5] sm:$0xff]
  %v1920 = vld [vmem:[%s5 + $0x8] sm:$0xff]
  %v1921 = vld [vmem:[%s5 + $0x10] sm:$0xff]
  %v1922 = vld [vmem:[%s5 + $0x18] sm:$0xff]
  %v1923 = vld [vmem:[%s6] sm:$0xff]
  %v1924 = vld [vmem:[%s6 + $0x8] sm:$0xff]
  %v1925 = vld [vmem:[%s6 + $0x10] sm:$0xff]
  %v1926 = vld [vmem:[%s6 + $0x18] sm:$0xff]
  %v1935 = vcombine.low %v1911, %v1912
  %v1936 = vcombine.low %v1913, %v1914
  %v1938 = vunpack.c.l.s4 1983009808
  %v1939 = vunpack.c.0.s8 %v1938
  %v1940 = vlaneseq
  %v1941 = vshrl.u32 %v1940, 7
  %v1942 = vsub.s32 %v1939, %v1941
  %v1943 = vrot.slane %v1935, %v1942
  %v1945 = vunpack.c.l.s4 1983009808
  %v1946 = vunpack.c.0.s8 %v1945
  %v1947 = vlaneseq
  %v1948 = vshrl.u32 %v1947, 7
  %v1949 = vsub.s32 %v1946, %v1948
  %v1950 = vrot.slane %v1936, %v1949
  %v1951 = vcombine.low %v1943, %v1950
  %v1952 = vcombine.low %v1915, %v1916
  %v1953 = vcombine.low %v1917, %v1918
  %v1955 = vunpack.c.l.s4 1983009808
  %v1956 = vunpack.c.0.s8 %v1955
  %v1957 = vlaneseq
  %v1958 = vshrl.u32 %v1957, 7
  %v1959 = vsub.s32 %v1956, %v1958
  %v1960 = vrot.slane %v1952, %v1959
  %v1962 = vunpack.c.l.s4 1983009808
  %v1963 = vunpack.c.0.s8 %v1962
  %v1964 = vlaneseq
  %v1965 = vshrl.u32 %v1964, 7
  %v1966 = vsub.s32 %v1963, %v1965
  %v1967 = vrot.slane %v1953, %v1966
  %v1968 = vcombine.low %v1960, %v1967
  %v1969 = vsel %vm51, %v1951, 0
  %v1971 = vsel %vm51, %v1968, 0
  %1973 = vmatprep.subr.mxu0 0.0
  %1974 = vmatpush1.msra.mxu0 %v1923
  %1975 = vmatprep.subr.mxu0 0.0
  %1976 = vmatpush1.msra.mxu0 %v1924
  %1977 = vmatprep.subr.mxu0 0.0
  %1978 = vmatpush1.msra.mxu0 %v1925
  %1979 = vmatprep.subr.mxu0 0.0
  %1980 = vmatpush1.msra.mxu0 %v1926
  %1981 = vmatprep.subr.mxu0 0.0
  %1982 = vmatpush1.msra.mxu0 0.0
  %1983 = vmatprep.subr.mxu0 0.0
  %1984 = vmatpush1.msra.mxu0 0.0
  %1985 = vmatprep.subr.mxu0 0.0
  %1986 = vmatpush1.msra.mxu0 0.0
  %1987 = vmatprep.subr.mxu0 0.0
  %1988 = vmatpush1.msra.mxu0 0.0
  %1989 = vmatprep.subr.mxu0 0.0
  %1990 = vmatpush1.msra.mxu0 0.0
  %1991 = vmatprep.subr.mxu0 0.0
  %1992 = vmatpush1.msra.mxu0 0.0
  %1993 = vmatprep.subr.mxu0 0.0
  %1994 = vmatpush1.msra.mxu0 0.0
  %1995 = vmatprep.subr.mxu0 0.0
  %1996 = vmatpush1.msra.mxu0 0.0
  %1997 = vmatprep.subr.mxu0 0.0
  %1998 = vmatpush1.msra.mxu0 0.0
  %1999 = vmatprep.subr.mxu0 0.0
  %2000 = vmatpush1.msra.mxu0 0.0
  %2001 = vmatprep.subr.mxu0 0.0
  %2002 = vmatpush1.msra.mxu0 0.0
  %2003 = vmatprep.subr.mxu0 0.0
  %2004 = vmatpush1.msra.mxu0 0.0
  %2005 = vmatprep.subr.mxu0 0.0
  %2006 = vmatpush1.msra.mxu0 0.0
  %2007 = vmatprep.subr.mxu0 0.0
  %2008 = vmatpush1.msra.mxu0 0.0
  %2009 = vmatprep.subr.mxu0 0.0
  %2010 = vmatpush1.msra.mxu0 0.0
  %2011 = vmatprep.subr.mxu0 0.0
  %2012 = vmatpush1.msra.mxu0 0.0
  %2013 = vmatprep.subr.mxu0 0.0
  %2014 = vmatpush1.msra.mxu0 0.0
  %2015 = vmatprep.subr.mxu0 0.0
  %2016 = vmatpush1.msra.mxu0 0.0
  %2017 = vmatprep.subr.mxu0 0.0
  %2018 = vmatpush1.msra.mxu0 0.0
  %2019 = vmatprep.subr.mxu0 0.0
  %2020 = vmatpush1.msra.mxu0 0.0
  %2021 = vmatprep.subr.mxu0 0.0
  %2022 = vmatpush1.msra.mxu0 0.0
  %2023 = vmatprep.subr.mxu0 0.0
  %2024 = vmatpush1.msra.mxu0 0.0
  %2025 = vmatprep.subr.mxu0 0.0
  %2026 = vmatpush1.msra.mxu0 0.0
  %2027 = vmatprep.subr.mxu0 0.0
  %2028 = vmatpush1.msra.mxu0 0.0
  %2029 = vmatprep.subr.mxu0 0.0
  %2030 = vmatpush1.msra.mxu0 0.0
  %2031 = vmatprep.subr.mxu0 0.0
  %2032 = vmatpush1.msra.mxu0 0.0
  %2033 = vmatprep.subr.mxu0 0.0
  %2034 = vmatpush1.msra.mxu0 0.0
  %2035 = vmatprep.subr.mxu0 0.0
  %2036 = vmatpush1.msra.mxu0 0.0
  %2037 = vmatprep.mubr.f32.mxu0 0.0
  %2038 = vmatmul.mubr.f32.gmra.mrb[0].mxu0 %v1969
  %v2039 = vpop.f32.mrb[0].mxu0
  %v2040 = vadd.f32 0.0, %v2039
  %v2041 = vpop.f32.mrb[0].mxu0
  %2042 = vmatprep.mubr.f32.mxu0 0.0
  %2043 = vmatmul.mubr.f32.gmra.mrb[0].mxu0 %v1971
  %v2044 = vpop.f32.mrb[0].mxu0
  %v2045 = vadd.f32 0.0, %v2044
  %v2046 = vpop.f32.mrb[0].mxu0
  %2047 = vdwg.mxu0
  %v2056 = vcombine.low %v1903, %v1904
  %v2057 = vcombine.low %v1905, %v1906
  %v2059 = vunpack.c.l.s4 1983009808
  %v2060 = vunpack.c.0.s8 %v2059
  %v2061 = vlaneseq
  %v2062 = vshrl.u32 %v2061, 7
  %v2063 = vsub.s32 %v2060, %v2062
  %v2064 = vrot.slane %v2056, %v2063
  %v2066 = vunpack.c.l.s4 1983009808
  %v2067 = vunpack.c.0.s8 %v2066
  %v2068 = vlaneseq
  %v2069 = vshrl.u32 %v2068, 7
  %v2070 = vsub.s32 %v2067, %v2069
  %v2071 = vrot.slane %v2057, %v2070
  %v2072 = vcombine.low %v2064, %v2071
  %v2073 = vcombine.low %v1907, %v1908
  %v2074 = vcombine.low %v1909, %v1910
  %v2076 = vunpack.c.l.s4 1983009808
  %v2077 = vunpack.c.0.s8 %v2076
  %v2078 = vlaneseq
  %v2079 = vshrl.u32 %v2078, 7
  %v2080 = vsub.s32 %v2077, %v2079
  %v2081 = vrot.slane %v2073, %v2080
  %v2083 = vunpack.c.l.s4 1983009808
  %v2084 = vunpack.c.0.s8 %v2083
  %v2085 = vlaneseq
  %v2086 = vshrl.u32 %v2085, 7
  %v2087 = vsub.s32 %v2084, %v2086
  %v2088 = vrot.slane %v2074, %v2087
  %v2089 = vcombine.low %v2081, %v2088
  %v2090 = vsel %vm51, %v2072, 0
  %v2092 = vsel %vm51, %v2089, 0
  %2094 = vmatprep.subr.mxu0 0.0
  %2095 = vmatpush1.msra.mxu0 %v1919
  %2096 = vmatprep.subr.mxu0 0.0
  %2097 = vmatpush1.msra.mxu0 %v1920
  %2098 = vmatprep.subr.mxu0 0.0
  %2099 = vmatpush1.msra.mxu0 %v1921
  %2100 = vmatprep.subr.mxu0 0.0
  %2101 = vmatpush1.msra.mxu0 %v1922
  %2102 = vmatprep.subr.mxu0 0.0
  %2103 = vmatpush1.msra.mxu0 0.0
  %2104 = vmatprep.subr.mxu0 0.0
  %2105 = vmatpush1.msra.mxu0 0.0
  %2106 = vmatprep.subr.mxu0 0.0
  %2107 = vmatpush1.msra.mxu0 0.0
  %2108 = vmatprep.subr.mxu0 0.0
  %2109 = vmatpush1.msra.mxu0 0.0
  %2110 = vmatprep.subr.mxu0 0.0
  %2111 = vmatpush1.msra.mxu0 0.0
  %2112 = vmatprep.subr.mxu0 0.0
  %2113 = vmatpush1.msra.mxu0 0.0
  %2114 = vmatprep.subr.mxu0 0.0
  %2115 = vmatpush1.msra.mxu0 0.0
  %2116 = vmatprep.subr.mxu0 0.0
  %2117 = vmatpush1.msra.mxu0 0.0
  %2118 = vmatprep.subr.mxu0 0.0
  %2119 = vmatpush1.msra.mxu0 0.0
  %2120 = vmatprep.subr.mxu0 0.0
  %2121 = vmatpush1.msra.mxu0 0.0
  %2122 = vmatprep.subr.mxu0 0.0
  %2123 = vmatpush1.msra.mxu0 0.0
  %2124 = vmatprep.subr.mxu0 0.0
  %2125 = vmatpush1.msra.mxu0 0.0
  %2126 = vmatprep.subr.mxu0 0.0
  %2127 = vmatpush1.msra.mxu0 0.0
  %2128 = vmatprep.subr.mxu0 0.0
  %2129 = vmatpush1.msra.mxu0 0.0
  %2130 = vmatprep.subr.mxu0 0.0
  %2131 = vmatpush1.msra.mxu0 0.0
  %2132 = vmatprep.subr.mxu0 0.0
  %2133 = vmatpush1.msra.mxu0 0.0
  %2134 = vmatprep.subr.mxu0 0.0
  %2135 = vmatpush1.msra.mxu0 0.0
  %2136 = vmatprep.subr.mxu0 0.0
  %2137 = vmatpush1.msra.mxu0 0.0
  %2138 = vmatprep.subr.mxu0 0.0
  %2139 = vmatpush1.msra.mxu0 0.0
  %2140 = vmatprep.subr.mxu0 0.0
  %2141 = vmatpush1.msra.mxu0 0.0
  %2142 = vmatprep.subr.mxu0 0.0
  %2143 = vmatpush1.msra.mxu0 0.0
  %2144 = vmatprep.subr.mxu0 0.0
  %2145 = vmatpush1.msra.mxu0 0.0
  %2146 = vmatprep.subr.mxu0 0.0
  %2147 = vmatpush1.msra.mxu0 0.0
  %2148 = vmatprep.subr.mxu0 0.0
  %2149 = vmatpush1.msra.mxu0 0.0
  %2150 = vmatprep.subr.mxu0 0.0
  %2151 = vmatpush1.msra.mxu0 0.0
  %2152 = vmatprep.subr.mxu0 0.0
  %2153 = vmatpush1.msra.mxu0 0.0
  %2154 = vmatprep.subr.mxu0 0.0
  %2155 = vmatpush1.msra.mxu0 0.0
  %2156 = vmatprep.subr.mxu0 0.0
  %2157 = vmatpush1.msra.mxu0 0.0
  %2158 = vmatprep.mubr.f32.mxu0 0.0
  %2159 = vmatmul.mubr.f32.gmra.mrb[0].mxu0 %v2090
  %v2160 = vpop.f32.mrb[0].mxu0
  %v2161 = vadd.f32 %v2040, %v2160
  %v2162 = vpop.f32.mrb[0].mxu0
  %2163 = vmatprep.mubr.f32.mxu0 0.0
  %2164 = vmatmul.mubr.f32.gmra.mrb[0].mxu0 %v2092
  %v2165 = vpop.f32.mrb[0].mxu0
  %v2166 = vadd.f32 %v2045, %v2165
  %v2167 = vpop.f32.mrb[0].mxu0
  %2168 = vdwg.mxu0
  %v2169 = vld [vmem:[%s7] sm:$0x1]
  %v2171 = vlaneseq
  %v2172 = vshrl.u32 %v2171, 7
  %v2173 = vsub.s32 0, %v2172
  %v2174 = vrot.slane %v2169, %v2173
  %v2176 = vadd.f32 %v2161, %v2174
  %v2177 = vadd.f32 %v2166, %v2174
  %vm2178 = vcmask 130048
  %v2179 = vsel %vm2178, %v2176, -inf
  %2180 = vmax.xlane.f32.xlu0 %v2179
  %v2181 = vpop.xlane.xlu0 %2180
  %v2182 = vsel %vm2178, %v2177, -inf
  %2183 = vmax.xlane.f32.xlu0 %v2182
  %v2184 = vpop.xlane.xlu0 %2183
  %v2185 = vsub.f32 %v2176, %v2181
  %v2186 = vsub.f32 %v2177, %v2184
  %v2187 = vmul.f32 %v2185, 1.442695
  %v2188 = vpow.pop %v2187
  %v2189 = vmul.f32 %v2186, 1.442695
  %v2190 = vpow.pop %v2189
  %v2191 = vsel %vm2178, %v2188, 0.0
  %2192 = vadd.xlane.f32.xlu0 %v2191
  %v2193 = vpop.xlane.xlu0 %2192
  %v2194 = vsel %vm2178, %v2190, 0.0
  %2195 = vadd.xlane.f32.xlu0 %v2194
  %v2196 = vpop.xlane.xlu0 %2195
  %v2197 = vrcp.pop %v2193
  %v2198 = vrcp.pop %v2196
  %v2199 = vmul.f32 %v2188, %v2197
  %v2200 = vmul.f32 %v2190, %v2198
  %2201 = vst.msk [vmem:[%s8] sm:$0xff] %vm2178, %v2199
  %2202 = vst.msk [vmem:[%s8 + $0x8] sm:$0xff] %vm2178, %v2200
  // Predicated region
  $region34: #{slot_tag_forward.1} parent=0 // pred_check
    _
  $region35: #{slot_tag_forward.1} parent=0 // pred_check_branch
    %2204 = sbr.rel (0) target = $region37
  $region36: #{slot_tag_forward.1} parent=0 // pred_region
    _
  $region37: #{slot_tag_forward.1} parent=0 // pred_fallthru
    _
  // Predicated region
  $region38: #{slot_tag_forward.1} parent=0 // pred_check
    _
  $region39: #{slot_tag_forward.1} parent=0 // pred_check_branch
    %2206 = sbr.rel (0) target = $region41
  $region40: #{slot_tag_forward.1} parent=0 // pred_region
    _
  $region41: #{slot_tag_forward.1} parent=0 // pred_fallthru
    _

</llo_original>
